<compile_context>
chip_gen: v5e
topology: v5e:2x2
jax: 0.10.0
libtpu: 0.0.40
codegen_flags: <defaults>
</compile_context>

<pallas_src>
import jax
import jax.numpy as jnp
from jax.experimental import pallas as pl
from jax.experimental.pallas import tpu as pltpu

PATCH = 16
HIDDEN = 768
TARGET_ROWS = 1024  # ~rows of patch matmul per grid step


def _embed_kernel(patches_ref, w_ref, pos_ref, cls_ref, out_ref):
    """One grid step handles `bt` whole images.

    patches_ref: (bt, n_patches, P)          bf16
    w_ref:       (P, HIDDEN)                 bf16  grid-invariant (resident)
    pos_ref:     (n_patches, HIDDEN)         f32   pos[1:] + conv bias (resident)
    cls_ref:     (1, HIDDEN)                 f32   cls_token + pos[0]  (resident)
    out_ref:     (bt, n_patches + 1, HIDDEN) f32   final embeddings
    """
    w = w_ref[...]
    pos = pos_ref[...]
    cls_row = cls_ref[...]
    bt = out_ref.shape[0]
    for b in range(bt):  # static unroll; bt is small
        acc = jnp.dot(patches_ref[b], w, preferred_element_type=jnp.float32)
        out_ref[b, 0:1, :] = cls_row
        out_ref[b, 1:, :] = acc + pos


def _pick_batch_tile(batch, n_patches, target_rows=TARGET_ROWS):
    """Largest divisor of `batch` with bt*n_patches <= target_rows, preferring
    choices that keep >= 2 grid steps (megacore / pipelining)."""
    divisors = [d for d in range(1, batch + 1)
                if batch % d == 0 and d * n_patches <= target_rows]
    if not divisors:
        return 1
    multi_step = [d for d in divisors if batch // d >= 2]
    return max(multi_step) if multi_step else max(divisors)


def embeddings_forward(x_nchw, conv_w, conv_b, cls_token, pos_emb):
    """x_nchw: (B, C, H, W) float32.  Returns (B, n_patches+1, 768) float32."""
    B, C, H, W = x_nchw.shape
    gh, gw = H // PATCH, W // PATCH
    n_patches = gh * gw
    P = C * PATCH * PATCH

    # ---- glue (cheap, fused by XLA under jit) -------------------------------
    # Non-overlapping 16x16 patches, inner order (C, kh, kw) to match the
    # PyTorch Conv2d weight flattening.  bf16 for the MXU.
    patches = x_nchw.reshape(B, C, gh, PATCH, gw, PATCH)
    patches = patches.transpose(0, 2, 4, 1, 3, 5).reshape(B, n_patches, P)
    patches = patches.astype(jnp.bfloat16)

    # Conv2d weight (768, C, 16, 16) -> (P, 768) matmul weight.
    w_mat = conv_w.reshape(HIDDEN, P).T.astype(jnp.bfloat16)

    # Fold conv bias into per-patch positional rows; fold pos[0] into cls row.
    pos = pos_emb.reshape(n_patches + 1, HIDDEN).astype(jnp.float32)
    pos_patch = pos[1:, :] + conv_b.reshape(1, HIDDEN).astype(jnp.float32)
    cls_row = cls_token.reshape(1, HIDDEN).astype(jnp.float32) + pos[0:1, :]

    bt = _pick_batch_tile(B, n_patches)
    grid = (B // bt,)

    out = pl.pallas_call(
        _embed_kernel,
        out_shape=jax.ShapeDtypeStruct((B, n_patches + 1, HIDDEN), jnp.float32),
        grid=grid,
        in_specs=[
            pl.BlockSpec((bt, n_patches, P), lambda i: (i, 0, 0)),
            pl.BlockSpec((P, HIDDEN), lambda i: (0, 0)),            # resident weight
            pl.BlockSpec((n_patches, HIDDEN), lambda i: (0, 0)),    # resident pos+bias
            pl.BlockSpec((1, HIDDEN), lambda i: (0, 0)),            # resident cls row
        ],
        out_specs=pl.BlockSpec((bt, n_patches + 1, HIDDEN), lambda i: (i, 0, 0)),
        compiler_params=pltpu.CompilerParams(
            dimension_semantics=("parallel",),
            vmem_limit_bytes=24 * 1024 * 1024,
        ),
    )(patches, w_mat, pos_patch, cls_row)

    # TODO(synk): Dropout(0.1) omitted (inference/eval semantics == identity).
    return out


def _reference(x_nchw, conv_w, conv_b, cls_token, pos_emb):
    """Plain-JAX f32 reference of the PyTorch forward (eval mode)."""
    B, C, H, W = x_nchw.shape
    gh, gw = H // PATCH, W // PATCH
    n_patches = gh * gw
    patches = x_nchw.reshape(B, C, gh, PATCH, gw, PATCH)
    patches = patches.transpose(0, 2, 4, 1, 3, 5).reshape(B, n_patches, -1)
    w_mat = conv_w.reshape(HIDDEN, -1).T
    pe = patches @ w_mat + conv_b[None, None, :]
    cls = jnp.broadcast_to(cls_token.reshape(1, 1, HIDDEN), (B, 1, HIDDEN))
    seq = jnp.concatenate([cls, pe], axis=1)
    return seq + pos_emb.reshape(1, n_patches + 1, HIDDEN)


if __name__ == "__main__":
    key = jax.random.PRNGKey(0)
    k1, k2, k3, k4, k5 = jax.random.split(key, 5)

    B, C, H, W = 2, 3, 32, 32          # img_size=32 -> n_patches=4, seq=5
    n_patches = (H // PATCH) * (W // PATCH)

    x = jax.random.normal(k1, (B, C, H, W), dtype=jnp.float32)

    # Parameters (shapes per Embeddings.__init__); small random values so the
    # cls-row / positional-add paths are actually exercised.
    conv_w = 0.02 * jax.random.normal(k2, (HIDDEN, C, PATCH, PATCH), jnp.float32)
    conv_b = 0.02 * jax.random.normal(k3, (HIDDEN,), jnp.float32)
    cls_token = 0.02 * jax.random.normal(k4, (1, 1, HIDDEN), jnp.float32)
    pos_emb = 0.02 * jax.random.normal(k5, (1, n_patches + 1, HIDDEN), jnp.float32)

    fwd = jax.jit(embeddings_forward)
    out = jax.block_until_ready(fwd(x, conv_w, conv_b, cls_token, pos_emb))

    ref = _reference(x, conv_w, conv_b, cls_token, pos_emb)
    assert out.shape == (B, n_patches + 1, HIDDEN), out.shape
    # bf16 MXU inputs with f32 accumulation (K=768): tolerance relaxed vs f32.
    err = float(jnp.max(jnp.abs(out - ref)))
    assert jnp.allclose(out, ref, atol=3e-2, rtol=3e-2), err

    print("KERNEL_OK")
</pallas_src>

<mosaic_0001>
module attributes {stable_mosaic.version = 11 : i64} {
  func.func @_embed_kernel(%arg0: i32, %arg1: memref<1x4x768xbf16, #tpu.memory_space<vmem>>, %arg2: memref<768x768xbf16, #tpu.memory_space<vmem>>, %arg3: memref<4x768xf32, #tpu.memory_space<vmem>>, %arg4: memref<1x768xf32, #tpu.memory_space<vmem>>, %arg5: memref<1x5x768xf32, #tpu.memory_space<vmem>>) attributes {dimension_semantics = [#tpu.dimension_semantics<parallel>], iteration_bounds = array<i64: 2>, scalar_prefetch = 0 : i64, scratch_operands = 0 : i64, tpu.core_type = #tpu.core_type<tc>, window_params = [{transform_indices = @transform_0, window_bounds = array<i64: 1, 4, 768>}, {pipeline_mode = #tpu.pipeline_mode<synchronous>, transform_indices = @transform_1, window_bounds = array<i64: 768, 768>}, {pipeline_mode = #tpu.pipeline_mode<synchronous>, transform_indices = @transform_2, window_bounds = array<i64: 4, 768>}, {pipeline_mode = #tpu.pipeline_mode<synchronous>, transform_indices = @transform_3, window_bounds = array<i64: 1, 768>}, {transform_indices = @transform_4, window_bounds = array<i64: 1, 5, 768>}]} {
    %c0 = arith.constant 0 : index
    %c0_0 = arith.constant 0 : index
    %0 = vector.load %arg2[%c0, %c0_0] : memref<768x768xbf16, #tpu.memory_space<vmem>>, vector<768x768xbf16>
    %c0_1 = arith.constant 0 : index
    %c0_2 = arith.constant 0 : index
    %1 = vector.load %arg3[%c0_1, %c0_2] : memref<4x768xf32, #tpu.memory_space<vmem>>, vector<4x768xf32>
    %c0_3 = arith.constant 0 : index
    %c0_4 = arith.constant 0 : index
    %2 = vector.load %arg4[%c0_3, %c0_4] : memref<1x768xf32, #tpu.memory_space<vmem>>, vector<1x768xf32>
    %c0_5 = arith.constant 0 : index
    %c0_6 = arith.constant 0 : index
    %c0_7 = arith.constant 0 : index
    %3 = vector.load %arg1[%c0_5, %c0_6, %c0_7] : memref<1x4x768xbf16, #tpu.memory_space<vmem>>, vector<1x4x768xbf16>
    %4 = vector.shape_cast %3 : vector<1x4x768xbf16> to vector<4x768xbf16>
    %cst = arith.constant dense<0.000000e+00> : vector<4x768xf32>
    %5 = tpu.matmul %4, %0, %cst {dimension_numbers = #tpu.dot_dimension_numbers<[1], [0], [0], [1], [0, 0, 1, 1], [], []>} : vector<4x768xbf16>, vector<768x768xbf16>, vector<4x768xf32> -> vector<4x768xf32>
    %c0_8 = arith.constant 0 : index
    %c0_9 = arith.constant 0 : index
    %c0_10 = arith.constant 0 : index
    %6 = vector.load %arg5[%c0_8, %c0_9, %c0_10] : memref<1x5x768xf32, #tpu.memory_space<vmem>>, vector<1x1x768xf32>
    %7 = vector.shape_cast %6 : vector<1x1x768xf32> to vector<1x768xf32>
    %8 = vector.shape_cast %2 : vector<1x768xf32> to vector<1x1x768xf32>
    tpu.vector_store %arg5[%c0_8, %c0_9, %c0_10], %8 {strides = array<i32>} : memref<1x5x768xf32, #tpu.memory_space<vmem>>, vector<1x1x768xf32>,
    %9 = arith.addf %5, %1 : vector<4x768xf32>
    %c0_11 = arith.constant 0 : index
    %c1 = arith.constant 1 : index
    %c0_12 = arith.constant 0 : index
    %10 = vector.load %arg5[%c0_11, %c1, %c0_12] : memref<1x5x768xf32, #tpu.memory_space<vmem>>, vector<1x4x768xf32>
    %11 = vector.shape_cast %10 : vector<1x4x768xf32> to vector<4x768xf32>
    %12 = vector.shape_cast %9 : vector<4x768xf32> to vector<1x4x768xf32>
    tpu.vector_store %arg5[%c0_11, %c1, %c0_12], %12 {strides = array<i32>} : memref<1x5x768xf32, #tpu.memory_space<vmem>>, vector<1x4x768xf32>,
    return
  }
  func.func @transform_0(%arg0: i32) -> (i32, i32, i32) {
    %c0_i32 = arith.constant 0 : i32
    %c0_i32_0 = arith.constant 0 : i32
    %c0_i32_1 = arith.constant 0 : i32
    return %arg0, %c0_i32, %c0_i32_0 : i32, i32, i32
  }
  func.func @transform_1(%arg0: i32) -> (i32, i32) {
    %c0_i32 = arith.constant 0 : i32
    %c0_i32_0 = arith.constant 0 : i32
    %c0_i32_1 = arith.constant 0 : i32
    return %c0_i32, %c0_i32_0 : i32, i32
  }
  func.func @transform_2(%arg0: i32) -> (i32, i32) {
    %c0_i32 = arith.constant 0 : i32
    %c0_i32_0 = arith.constant 0 : i32
    %c0_i32_1 = arith.constant 0 : i32
    return %c0_i32, %c0_i32_0 : i32, i32
  }
  func.func @transform_3(%arg0: i32) -> (i32, i32) {
    %c0_i32 = arith.constant 0 : i32
    %c0_i32_0 = arith.constant 0 : i32
    %c0_i32_1 = arith.constant 0 : i32
    return %c0_i32, %c0_i32_0 : i32, i32
  }
  func.func @transform_4(%arg0: i32) -> (i32, i32, i32) {
    %c0_i32 = arith.constant 0 : i32
    %c0_i32_0 = arith.constant 0 : i32
    %c0_i32_1 = arith.constant 0 : i32
    return %arg0, %c0_i32, %c0_i32_0 : i32, i32, i32
  }
}

</mosaic_0001>

<llo_original>
// kernel: embeddings_forward.1
$region0: #{embeddings_forward.1}
  #allocation0 [shape = 'u32[]', space=smem, size = 0x4, offset = 0x4, fixed_abs, tag = 'smem constant byte address 0x4 - core index']
  #allocation1 [shape = 'u32[72,128]{1,0:T(1,128)}', space=vmem, size = 0x9000, scoped, tag = 'internal scratch']
  %s0 = inlined_call_operand.vmem [shape: bf16[2,4,768], index: 0, kind: input, shape index: {}]
  %s1 = inlined_call_operand.vmem [shape: bf16[768,768], index: 1, kind: input, shape index: {}]
  %s2 = inlined_call_operand.vmem [shape: f32[4,768], index: 2, kind: input, shape index: {}]
  %s3 = inlined_call_operand.vmem [shape: f32[1,768], index: 3, kind: input, shape index: {}]
  %s4 = inlined_call_operand.vmem [shape: f32[2,5,768], index: 4, kind: output, shape index: {}]
  %s5 = sld [smem:[#allocation0]]
  $region49: #{embeddings_forward.1} parent=0
    _
  %s7 = ssub.s32 1, %s5
  %s8 = scalar_select 0, %s7, %s5
  loop: start=0, step=1, limit=4
  $region2: #{embeddings_forward.1} parent=0 // loop_pre_header
    _
  $region3: #{embeddings_forward.1} parent=0 // loop_header
    %s10 = sphi 0, %s14
    %p11 = scmp.ge.s32.totalorder %s10, 4
    %s20 = sphi 0, %s22
    %s23 = sphi 0, %s20
    %s24 = sphi 0, %s23
    %s40 = sphi 0, %s24
    %s44 = sphi 0, %s44
    %s46 = sphi 0, %s44
    %s47 = sphi 0, %s46
    %s61 = sphi 0, %s47
    %s65 = sphi 0, %s65
    %s67 = sphi 0, %s65
    %s68 = sphi 0, %s67
    %s82 = sphi 0, %s68
    %s86 = sphi 0, %s86
    %s88 = sphi 0, %s86
    %s89 = sphi 0, %s88
    %s103 = sphi 0, %s89
    %s109 = sphi 0, %s111
    %s112 = sphi 0, %s109
    %s113 = sphi 0, %s112
    %s129 = sphi 0, %s113
  $region4: #{embeddings_forward.1} parent=0 // loop_header_branch
    %13 = sbr.rel (%p11) target = $region8
  $region5: #{embeddings_forward.1} parent=0 // loop_body
    %s15 = ssub.s32 %s10, 1
    %s16 = ssub.s32 %s10, 2
    %s17 = sadd.s32 %s10, 1
    %s18 = ssub.s32 %s10, %s17
    %p19 = scmp.eq.s32.totalorder %s18, 0
    %s21 = sadd.s32 %s20, 1
    %s22 = scalar_select %p19, %s20, %s21
    %p25 = pneg %p19
    %p26 = scmp.eq.s32.totalorder %s10, 1
    %p27 = por %p25, %p26
    %p28 = scmp.ne.s32.totalorder %s20, %s23
    %p29 = scmp.eq.s32.totalorder %s10, 0
    %p30 = por %p28, %p29
    %p31 = scmp.ne.s32.totalorder %s20, %s23
    %p32 = scmp.eq.s32.totalorder %s15, 1
    %p33 = por %p31, %p32
    %p34 = scmp.ne.s32.totalorder %s23, %s24
    %p35 = scmp.eq.s32.totalorder %s15, 0
    %p36 = por %p34, %p35
    %p37 = scmp.ne.s32.totalorder %s23, %s24
    %p38 = scmp.eq.s32.totalorder %s16, 1
    %p39 = por %p37, %p38
    %p41 = scmp.ne.s32.totalorder %s24, %s40
    %p42 = scmp.eq.s32.totalorder %s16, 0
    %p43 = por %p41, %p42
    %s45 = sadd.s32 %s44, 1
    %p48 = scmp.eq.s32.totalorder %s10, 1
    %p49 = scmp.ne.s32.totalorder %s44, %s46
    %p50 = scmp.eq.s32.totalorder %s10, 0
    %p51 = por %p49, %p50
    %p52 = scmp.ne.s32.totalorder %s44, %s46
    %p53 = scmp.eq.s32.totalorder %s15, 1
    %p54 = por %p52, %p53
    %p55 = scmp.ne.s32.totalorder %s46, %s47
    %p56 = scmp.eq.s32.totalorder %s15, 0
    %p57 = por %p55, %p56
    %p58 = scmp.ne.s32.totalorder %s46, %s47
    %p59 = scmp.eq.s32.totalorder %s16, 1
    %p60 = por %p58, %p59
    %p62 = scmp.ne.s32.totalorder %s47, %s61
    %p63 = scmp.eq.s32.totalorder %s16, 0
    %p64 = por %p62, %p63
    %s66 = sadd.s32 %s65, 1
    %p69 = scmp.eq.s32.totalorder %s10, 1
    %p70 = scmp.ne.s32.totalorder %s65, %s67
    %p71 = scmp.eq.s32.totalorder %s10, 0
    %p72 = por %p70, %p71
    %p73 = scmp.ne.s32.totalorder %s65, %s67
    %p74 = scmp.eq.s32.totalorder %s15, 1
    %p75 = por %p73, %p74
    %p76 = scmp.ne.s32.totalorder %s67, %s68
    %p77 = scmp.eq.s32.totalorder %s15, 0
    %p78 = por %p76, %p77
    %p79 = scmp.ne.s32.totalorder %s67, %s68
    %p80 = scmp.eq.s32.totalorder %s16, 1
    %p81 = por %p79, %p80
    %p83 = scmp.ne.s32.totalorder %s68, %s82
    %p84 = scmp.eq.s32.totalorder %s16, 0
    %p85 = por %p83, %p84
    %s87 = sadd.s32 %s86, 1
    %p90 = scmp.eq.s32.totalorder %s10, 1
    %p91 = scmp.ne.s32.totalorder %s86, %s88
    %p92 = scmp.eq.s32.totalorder %s10, 0
    %p93 = por %p91, %p92
    %p94 = scmp.ne.s32.totalorder %s86, %s88
    %p95 = scmp.eq.s32.totalorder %s15, 1
    %p96 = por %p94, %p95
    %p97 = scmp.ne.s32.totalorder %s88, %s89
    %p98 = scmp.eq.s32.totalorder %s15, 0
    %p99 = por %p97, %p98
    %p100 = scmp.ne.s32.totalorder %s88, %s89
    %p101 = scmp.eq.s32.totalorder %s16, 1
    %p102 = por %p100, %p101
    %p104 = scmp.ne.s32.totalorder %s89, %s103
    %p105 = scmp.eq.s32.totalorder %s16, 0
    %p106 = por %p104, %p105
    %s107 = ssub.s32 %s10, %s17
    %p108 = scmp.eq.s32.totalorder %s107, 0
    %s110 = sadd.s32 %s109, 1
    %s111 = scalar_select %p108, %s109, %s110
    %p114 = pneg %p108
    %p115 = scmp.eq.s32.totalorder %s10, 1
    %p116 = por %p114, %p115
    %p117 = scmp.ne.s32.totalorder %s109, %s112
    %p118 = scmp.eq.s32.totalorder %s10, 0
    %p119 = por %p117, %p118
    %p120 = scmp.ne.s32.totalorder %s109, %s112
    %p121 = scmp.eq.s32.totalorder %s15, 1
    %p122 = por %p120, %p121
    %p123 = scmp.ne.s32.totalorder %s112, %s113
    %p124 = scmp.eq.s32.totalorder %s15, 0
    %p125 = por %p123, %p124
    %p126 = scmp.ne.s32.totalorder %s112, %s113
    %p127 = scmp.eq.s32.totalorder %s16, 1
    %p128 = por %p126, %p127
    %p130 = scmp.ne.s32.totalorder %s113, %s129
    %p131 = scmp.eq.s32.totalorder %s16, 0
    %p132 = por %p130, %p131
    %p133 = scmp.le.s32.totalorder 1, %s10
    %p134 = scmp.lt.s32.totalorder %s10, 3
    %p135 = pnand %p133, %p134
    %p136 = pneg %p135
    // Predicated region
    $region9: #{embeddings_forward.1} parent=5 // pred_check
      _
    $region10: #{embeddings_forward.1} parent=5 // pred_check_branch
      %138 = sbr.rel (%p135) target = $region12
    $region11: #{embeddings_forward.1} parent=5 // pred_region
      %s139 = ssub.s32 %s10, 1
      // Predicated region
      $region13: #{embeddings_forward.1} parent=11 // pred_check
        %p140 = pneg %p57
      $region14: #{embeddings_forward.1} parent=11 // pred_check_branch
        %142 = sbr.rel (%p140) target = $region16
      $region15: #{embeddings_forward.1} parent=11 // pred_region
        _
      $region16: #{embeddings_forward.1} parent=11 // pred_fallthru
        _
      // Predicated region
      $region17: #{embeddings_forward.1} parent=11 // pred_check
        %p143 = pneg %p78
      $region18: #{embeddings_forward.1} parent=11 // pred_check_branch
        %145 = sbr.rel (%p143) target = $region20
      $region19: #{embeddings_forward.1} parent=11 // pred_region
        _
      $region20: #{embeddings_forward.1} parent=11 // pred_fallthru
        _
      // Predicated region
      $region21: #{embeddings_forward.1} parent=11 // pred_check
        %p146 = pneg %p99
      $region22: #{embeddings_forward.1} parent=11 // pred_check_branch
        %148 = sbr.rel (%p146) target = $region24
      $region23: #{embeddings_forward.1} parent=11 // pred_region
        _
      $region24: #{embeddings_forward.1} parent=11 // pred_fallthru
        _
    $region12: #{embeddings_forward.1} parent=5 // pred_fallthru
      _
    %p149 = scmp.lt.s32.totalorder %s10, 2
    // Predicated region
    $region25: #{embeddings_forward.1} parent=5 // pred_check
      %p150 = pneg %p149
    $region26: #{embeddings_forward.1} parent=5 // pred_check_branch
      %152 = sbr.rel (%p150) target = $region28
    $region27: #{embeddings_forward.1} parent=5 // pred_region
      // Predicated region
      $region29: #{embeddings_forward.1} parent=27 // pred_check
        %p153 = pneg %p30
      $region30: #{embeddings_forward.1} parent=27 // pred_check_branch
        %155 = sbr.rel (%p153) target = $region32
      $region31: #{embeddings_forward.1} parent=27 // pred_region
        %p156 = scmp.lt.s32.totalorder %s10, 1
        %s157 = scalar_select %p156, %s10, 1
        %s158 = smul.addr %s157, 6
        %s159 = smul.addr %s158, 2
        %s160 = scalar_lea.vmem %s0, %s159
      $region32: #{embeddings_forward.1} parent=27 // pred_fallthru
        _
    $region28: #{embeddings_forward.1} parent=5 // pred_fallthru
      _
    %p161 = scmp.le.s32.totalorder 1, %s10
    %p162 = scmp.lt.s32.totalorder %s10, 3
    %p163 = pnand %p161, %p162
    %p164 = pneg %p163
    // Predicated region
    $region33: #{embeddings_forward.1} parent=5 // pred_check
      _
    $region34: #{embeddings_forward.1} parent=5 // pred_check_branch
      %166 = sbr.rel (%p163) target = $region36
    $region35: #{embeddings_forward.1} parent=5 // pred_region
      %s167 = ssub.s32 %s10, 1
      %p168 = scmp.lt.s32.totalorder %s15, 1
      %s169 = scalar_select %p168, %s15, 1
      %s170 = smul.addr %s169, 6
      %s171 = smul.addr %s170, 2
      %s172 = scalar_lea.vmem %s0, %s171
      %p173 = pneg %p36
      %p174 = pneg %p33
      %p175 = pneg %p57
      %p176 = pneg %p54
      %p177 = pneg %p78
      %p178 = pneg %p75
      %p179 = pneg %p99
      %p180 = pneg %p96
      %p181 = pneg %p125
      %p182 = pneg %p122
      %p183 = scmp.lt.s32.totalorder %s15, 1
      %s184 = scalar_select %p183, %s15, 1
      %s185 = smul.addr %s184, 6
      %s186 = smul.addr %s185, 8
      %s187 = scalar_lea.vmem %s4, %s186
      %p188 = scmp.lt.s32.totalorder %s15, 1
      %s189 = scalar_select %p188, %s15, 1
      %s190 = smul.addr %s189, 6
      %s191 = smul.addr %s190, 2
      %s192 = scalar_lea.vmem %s0, %s191
      %p193 = scmp.lt.s32.totalorder %s15, 1
      %s194 = scalar_select %p193, %s15, 1
      %s195 = smul.addr %s194, 6
      %s196 = smul.addr %s195, 8
      %s197 = scalar_lea.vmem %s4, %s196
      %v198 = vld [vmem:[%s1] sm:$0xff]
      %v199 = vld [vmem:[%s1 + $0x8] sm:$0xff]
      %v200 = vld [vmem:[%s1 + $0x10] sm:$0xff]
      %v201 = vld [vmem:[%s1 + $0x18] sm:$0xff]
      %v202 = vld [vmem:[%s1 + $0x20] sm:$0xff]
      %v203 = vld [vmem:[%s1 + $0x28] sm:$0xff]
      %v204 = vld [vmem:[%s1 + $0x30] sm:$0xff]
      %v205 = vld [vmem:[%s1 + $0x38] sm:$0xff]
      %v206 = vld [vmem:[%s1 + $0x40] sm:$0xff]
      %v207 = vld [vmem:[%s1 + $0x48] sm:$0xff]
      %v208 = vld [vmem:[%s1 + $0x50] sm:$0xff]
      %v209 = vld [vmem:[%s1 + $0x58] sm:$0xff]
      %v210 = vld [vmem:[%s1 + $0x60] sm:$0xff]
      %v211 = vld [vmem:[%s1 + $0x68] sm:$0xff]
      %v212 = vld [vmem:[%s1 + $0x70] sm:$0xff]
      %v213 = vld [vmem:[%s1 + $0x78] sm:$0xff]
      %v214 = vld [vmem:[%s1 + $0x80] sm:$0xff]
      %v215 = vld [vmem:[%s1 + $0x88] sm:$0xff]
      %v216 = vld [vmem:[%s1 + $0x90] sm:$0xff]
      %v217 = vld [vmem:[%s1 + $0x98] sm:$0xff]
      %v218 = vld [vmem:[%s1 + $0xa0] sm:$0xff]
      %v219 = vld [vmem:[%s1 + $0xa8] sm:$0xff]
      %v220 = vld [vmem:[%s1 + $0xb0] sm:$0xff]
      %v221 = vld [vmem:[%s1 + $0xb8] sm:$0xff]
      %v222 = vld [vmem:[%s1 + $0xc0] sm:$0xff]
      %v223 = vld [vmem:[%s1 + $0xc8] sm:$0xff]
      %v224 = vld [vmem:[%s1 + $0xd0] sm:$0xff]
      %v225 = vld [vmem:[%s1 + $0xd8] sm:$0xff]
      %v226 = vld [vmem:[%s1 + $0xe0] sm:$0xff]
      %v227 = vld [vmem:[%s1 + $0xe8] sm:$0xff]
      %v228 = vld [vmem:[%s1 + $0xf0] sm:$0xff]
      %v229 = vld [vmem:[%s1 + $0xf8] sm:$0xff]
      %v230 = vld [vmem:[%s1 + $0x100] sm:$0xff]
      %v231 = vld [vmem:[%s1 + $0x108] sm:$0xff]
      %v232 = vld [vmem:[%s1 + $0x110] sm:$0xff]
      %v233 = vld [vmem:[%s1 + $0x118] sm:$0xff]
      %v234 = vld [vmem:[%s1 + $0x120] sm:$0xff]
      %v235 = vld [vmem:[%s1 + $0x128] sm:$0xff]
      %v236 = vld [vmem:[%s1 + $0x130] sm:$0xff]
      %v237 = vld [vmem:[%s1 + $0x138] sm:$0xff]
      %v238 = vld [vmem:[%s1 + $0x140] sm:$0xff]
      %v239 = vld [vmem:[%s1 + $0x148] sm:$0xff]
      %v240 = vld [vmem:[%s1 + $0x150] sm:$0xff]
      %v241 = vld [vmem:[%s1 + $0x158] sm:$0xff]
      %v242 = vld [vmem:[%s1 + $0x160] sm:$0xff]
      %v243 = vld [vmem:[%s1 + $0x168] sm:$0xff]
      %v244 = vld [vmem:[%s1 + $0x170] sm:$0xff]
      %v245 = vld [vmem:[%s1 + $0x178] sm:$0xff]
      %v246 = vld [vmem:[%s1 + $0x180] sm:$0xff]
      %v247 = vld [vmem:[%s1 + $0x188] sm:$0xff]
      %v248 = vld [vmem:[%s1 + $0x190] sm:$0xff]
      %v249 = vld [vmem:[%s1 + $0x198] sm:$0xff]
      %v250 = vld [vmem:[%s1 + $0x1a0] sm:$0xff]
      %v251 = vld [vmem:[%s1 + $0x1a8] sm:$0xff]
      %v252 = vld [vmem:[%s1 + $0x1b0] sm:$0xff]
      %v253 = vld [vmem:[%s1 + $0x1b8] sm:$0xff]
      %v254 = vld [vmem:[%s1 + $0x1c0] sm:$0xff]
      %v255 = vld [vmem:[%s1 + $0x1c8] sm:$0xff]
      %v256 = vld [vmem:[%s1 + $0x1d0] sm:$0xff]
      %v257 = vld [vmem:[%s1 + $0x1d8] sm:$0xff]
      %v258 = vld [vmem:[%s1 + $0x1e0] sm:$0xff]
      %v259 = vld [vmem:[%s1 + $0x1e8] sm:$0xff]
      %v260 = vld [vmem:[%s1 + $0x1f0] sm:$0xff]
      %v261 = vld [vmem:[%s1 + $0x1f8] sm:$0xff]
      %v262 = vld [vmem:[%s1 + $0x200] sm:$0xff]
      %v263 = vld [vmem:[%s1 + $0x208] sm:$0xff]
      %v264 = vld [vmem:[%s1 + $0x210] sm:$0xff]
      %v265 = vld [vmem:[%s1 + $0x218] sm:$0xff]
      %v266 = vld [vmem:[%s1 + $0x220] sm:$0xff]
      %v267 = vld [vmem:[%s1 + $0x228] sm:$0xff]
      %v268 = vld [vmem:[%s1 + $0x230] sm:$0xff]
      %v269 = vld [vmem:[%s1 + $0x238] sm:$0xff]
      %v270 = vld [vmem:[%s1 + $0x240] sm:$0xff]
      %v271 = vld [vmem:[%s1 + $0x248] sm:$0xff]
      %v272 = vld [vmem:[%s1 + $0x250] sm:$0xff]
      %v273 = vld [vmem:[%s1 + $0x258] sm:$0xff]
      %v274 = vld [vmem:[%s1 + $0x260] sm:$0xff]
      %v275 = vld [vmem:[%s1 + $0x268] sm:$0xff]
      %v276 = vld [vmem:[%s1 + $0x270] sm:$0xff]
      %v277 = vld [vmem:[%s1 + $0x278] sm:$0xff]
      %v278 = vld [vmem:[%s1 + $0x280] sm:$0xff]
      %v279 = vld [vmem:[%s1 + $0x288] sm:$0xff]
      %v280 = vld [vmem:[%s1 + $0x290] sm:$0xff]
      %v281 = vld [vmem:[%s1 + $0x298] sm:$0xff]
      %v282 = vld [vmem:[%s1 + $0x2a0] sm:$0xff]
      %v283 = vld [vmem:[%s1 + $0x2a8] sm:$0xff]
      %v284 = vld [vmem:[%s1 + $0x2b0] sm:$0xff]
      %v285 = vld [vmem:[%s1 + $0x2b8] sm:$0xff]
      %v286 = vld [vmem:[%s1 + $0x2c0] sm:$0xff]
      %v287 = vld [vmem:[%s1 + $0x2c8] sm:$0xff]
      %v288 = vld [vmem:[%s1 + $0x2d0] sm:$0xff]
      %v289 = vld [vmem:[%s1 + $0x2d8] sm:$0xff]
      %v290 = vld [vmem:[%s1 + $0x2e0] sm:$0xff]
      %v291 = vld [vmem:[%s1 + $0x2e8] sm:$0xff]
      %v292 = vld [vmem:[%s1 + $0x2f0] sm:$0xff]
      %v293 = vld [vmem:[%s1 + $0x2f8] sm:$0xff]
      %v294 = vld [vmem:[%s1 + $0x300] sm:$0xff]
      %v295 = vld [vmem:[%s1 + $0x308] sm:$0xff]
      %v296 = vld [vmem:[%s1 + $0x310] sm:$0xff]
      %v297 = vld [vmem:[%s1 + $0x318] sm:$0xff]
      %v298 = vld [vmem:[%s1 + $0x320] sm:$0xff]
      %v299 = vld [vmem:[%s1 + $0x328] sm:$0xff]
      %v300 = vld [vmem:[%s1 + $0x330] sm:$0xff]
      %v301 = vld [vmem:[%s1 + $0x338] sm:$0xff]
      %v302 = vld [vmem:[%s1 + $0x340] sm:$0xff]
      %v303 = vld [vmem:[%s1 + $0x348] sm:$0xff]
      %v304 = vld [vmem:[%s1 + $0x350] sm:$0xff]
      %v305 = vld [vmem:[%s1 + $0x358] sm:$0xff]
      %v306 = vld [vmem:[%s1 + $0x360] sm:$0xff]
      %v307 = vld [vmem:[%s1 + $0x368] sm:$0xff]
      %v308 = vld [vmem:[%s1 + $0x370] sm:$0xff]
      %v309 = vld [vmem:[%s1 + $0x378] sm:$0xff]
      %v310 = vld [vmem:[%s1 + $0x380] sm:$0xff]
      %v311 = vld [vmem:[%s1 + $0x388] sm:$0xff]
      %v312 = vld [vmem:[%s1 + $0x390] sm:$0xff]
      %v313 = vld [vmem:[%s1 + $0x398] sm:$0xff]
      %v314 = vld [vmem:[%s1 + $0x3a0] sm:$0xff]
      %v315 = vld [vmem:[%s1 + $0x3a8] sm:$0xff]
      %v316 = vld [vmem:[%s1 + $0x3b0] sm:$0xff]
      %v317 = vld [vmem:[%s1 + $0x3b8] sm:$0xff]
      %v318 = vld [vmem:[%s1 + $0x3c0] sm:$0xff]
      %v319 = vld [vmem:[%s1 + $0x3c8] sm:$0xff]
      %v320 = vld [vmem:[%s1 + $0x3d0] sm:$0xff]
      %v321 = vld [vmem:[%s1 + $0x3d8] sm:$0xff]
      %v322 = vld [vmem:[%s1 + $0x3e0] sm:$0xff]
      %v323 = vld [vmem:[%s1 + $0x3e8] sm:$0xff]
      %v324 = vld [vmem:[%s1 + $0x3f0] sm:$0xff]
      %v325 = vld [vmem:[%s1 + $0x3f8] sm:$0xff]
      %v326 = vld [vmem:[%s1 + $0x400] sm:$0xff]
      %v327 = vld [vmem:[%s1 + $0x408] sm:$0xff]
      %v328 = vld [vmem:[%s1 + $0x410] sm:$0xff]
      %v329 = vld [vmem:[%s1 + $0x418] sm:$0xff]
      %v330 = vld [vmem:[%s1 + $0x420] sm:$0xff]
      %v331 = vld [vmem:[%s1 + $0x428] sm:$0xff]
      %v332 = vld [vmem:[%s1 + $0x430] sm:$0xff]
      %v333 = vld [vmem:[%s1 + $0x438] sm:$0xff]
      %v334 = vld [vmem:[%s1 + $0x440] sm:$0xff]
      %v335 = vld [vmem:[%s1 + $0x448] sm:$0xff]
      %v336 = vld [vmem:[%s1 + $0x450] sm:$0xff]
      %v337 = vld [vmem:[%s1 + $0x458] sm:$0xff]
      %v338 = vld [vmem:[%s1 + $0x460] sm:$0xff]
      %v339 = vld [vmem:[%s1 + $0x468] sm:$0xff]
      %v340 = vld [vmem:[%s1 + $0x470] sm:$0xff]
      %v341 = vld [vmem:[%s1 + $0x478] sm:$0xff]
      %v342 = vld [vmem:[%s1 + $0x480] sm:$0xff]
      %v343 = vld [vmem:[%s1 + $0x488] sm:$0xff]
      %v344 = vld [vmem:[%s1 + $0x490] sm:$0xff]
      %v345 = vld [vmem:[%s1 + $0x498] sm:$0xff]
      %v346 = vld [vmem:[%s1 + $0x4a0] sm:$0xff]
      %v347 = vld [vmem:[%s1 + $0x4a8] sm:$0xff]
      %v348 = vld [vmem:[%s1 + $0x4b0] sm:$0xff]
      %v349 = vld [vmem:[%s1 + $0x4b8] sm:$0xff]
      %v350 = vld [vmem:[%s1 + $0x4c0] sm:$0xff]
      %v351 = vld [vmem:[%s1 + $0x4c8] sm:$0xff]
      %v352 = vld [vmem:[%s1 + $0x4d0] sm:$0xff]
      %v353 = vld [vmem:[%s1 + $0x4d8] sm:$0xff]
      %v354 = vld [vmem:[%s1 + $0x4e0] sm:$0xff]
      %v355 = vld [vmem:[%s1 + $0x4e8] sm:$0xff]
      %v356 = vld [vmem:[%s1 + $0x4f0] sm:$0xff]
      %v357 = vld [vmem:[%s1 + $0x4f8] sm:$0xff]
      %v358 = vld [vmem:[%s1 + $0x500] sm:$0xff]
      %v359 = vld [vmem:[%s1 + $0x508] sm:$0xff]
      %v360 = vld [vmem:[%s1 + $0x510] sm:$0xff]
      %v361 = vld [vmem:[%s1 + $0x518] sm:$0xff]
      %v362 = vld [vmem:[%s1 + $0x520] sm:$0xff]
      %v363 = vld [vmem:[%s1 + $0x528] sm:$0xff]
      %v364 = vld [vmem:[%s1 + $0x530] sm:$0xff]
      %v365 = vld [vmem:[%s1 + $0x538] sm:$0xff]
      %v366 = vld [vmem:[%s1 + $0x540] sm:$0xff]
      %v367 = vld [vmem:[%s1 + $0x548] sm:$0xff]
      %v368 = vld [vmem:[%s1 + $0x550] sm:$0xff]
      %v369 = vld [vmem:[%s1 + $0x558] sm:$0xff]
      %v370 = vld [vmem:[%s1 + $0x560] sm:$0xff]
      %v371 = vld [vmem:[%s1 + $0x568] sm:$0xff]
      %v372 = vld [vmem:[%s1 + $0x570] sm:$0xff]
      %v373 = vld [vmem:[%s1 + $0x578] sm:$0xff]
      %v374 = vld [vmem:[%s1 + $0x580] sm:$0xff]
      %v375 = vld [vmem:[%s1 + $0x588] sm:$0xff]
      %v376 = vld [vmem:[%s1 + $0x590] sm:$0xff]
      %v377 = vld [vmem:[%s1 + $0x598] sm:$0xff]
      %v378 = vld [vmem:[%s1 + $0x5a0] sm:$0xff]
      %v379 = vld [vmem:[%s1 + $0x5a8] sm:$0xff]
      %v380 = vld [vmem:[%s1 + $0x5b0] sm:$0xff]
      %v381 = vld [vmem:[%s1 + $0x5b8] sm:$0xff]
      %v382 = vld [vmem:[%s1 + $0x5c0] sm:$0xff]
      %v383 = vld [vmem:[%s1 + $0x5c8] sm:$0xff]
      %v384 = vld [vmem:[%s1 + $0x5d0] sm:$0xff]
      %v385 = vld [vmem:[%s1 + $0x5d8] sm:$0xff]
      %v386 = vld [vmem:[%s1 + $0x5e0] sm:$0xff]
      %v387 = vld [vmem:[%s1 + $0x5e8] sm:$0xff]
      %v388 = vld [vmem:[%s1 + $0x5f0] sm:$0xff]
      %v389 = vld [vmem:[%s1 + $0x5f8] sm:$0xff]
      %v390 = vld [vmem:[%s1 + $0x600] sm:$0xff]
      %v391 = vld [vmem:[%s1 + $0x608] sm:$0xff]
      %v392 = vld [vmem:[%s1 + $0x610] sm:$0xff]
      %v393 = vld [vmem:[%s1 + $0x618] sm:$0xff]
      %v394 = vld [vmem:[%s1 + $0x620] sm:$0xff]
      %v395 = vld [vmem:[%s1 + $0x628] sm:$0xff]
      %v396 = vld [vmem:[%s1 + $0x630] sm:$0xff]
      %v397 = vld [vmem:[%s1 + $0x638] sm:$0xff]
      %v398 = vld [vmem:[%s1 + $0x640] sm:$0xff]
      %v399 = vld [vmem:[%s1 + $0x648] sm:$0xff]
      %v400 = vld [vmem:[%s1 + $0x650] sm:$0xff]
      %v401 = vld [vmem:[%s1 + $0x658] sm:$0xff]
      %v402 = vld [vmem:[%s1 + $0x660] sm:$0xff]
      %v403 = vld [vmem:[%s1 + $0x668] sm:$0xff]
      %v404 = vld [vmem:[%s1 + $0x670] sm:$0xff]
      %v405 = vld [vmem:[%s1 + $0x678] sm:$0xff]
      %v406 = vld [vmem:[%s1 + $0x680] sm:$0xff]
      %v407 = vld [vmem:[%s1 + $0x688] sm:$0xff]
      %v408 = vld [vmem:[%s1 + $0x690] sm:$0xff]
      %v409 = vld [vmem:[%s1 + $0x698] sm:$0xff]
      %v410 = vld [vmem:[%s1 + $0x6a0] sm:$0xff]
      %v411 = vld [vmem:[%s1 + $0x6a8] sm:$0xff]
      %v412 = vld [vmem:[%s1 + $0x6b0] sm:$0xff]
      %v413 = vld [vmem:[%s1 + $0x6b8] sm:$0xff]
      %v414 = vld [vmem:[%s1 + $0x6c0] sm:$0xff]
      %v415 = vld [vmem:[%s1 + $0x6c8] sm:$0xff]
      %v416 = vld [vmem:[%s1 + $0x6d0] sm:$0xff]
      %v417 = vld [vmem:[%s1 + $0x6d8] sm:$0xff]
      %v418 = vld [vmem:[%s1 + $0x6e0] sm:$0xff]
      %v419 = vld [vmem:[%s1 + $0x6e8] sm:$0xff]
      %v420 = vld [vmem:[%s1 + $0x6f0] sm:$0xff]
      %v421 = vld [vmem:[%s1 + $0x6f8] sm:$0xff]
      %v422 = vld [vmem:[%s1 + $0x700] sm:$0xff]
      %v423 = vld [vmem:[%s1 + $0x708] sm:$0xff]
      %v424 = vld [vmem:[%s1 + $0x710] sm:$0xff]
      %v425 = vld [vmem:[%s1 + $0x718] sm:$0xff]
      %v426 = vld [vmem:[%s1 + $0x720] sm:$0xff]
      %v427 = vld [vmem:[%s1 + $0x728] sm:$0xff]
      %v428 = vld [vmem:[%s1 + $0x730] sm:$0xff]
      %v429 = vld [vmem:[%s1 + $0x738] sm:$0xff]
      %v430 = vld [vmem:[%s1 + $0x740] sm:$0xff]
      %v431 = vld [vmem:[%s1 + $0x748] sm:$0xff]
      %v432 = vld [vmem:[%s1 + $0x750] sm:$0xff]
      %v433 = vld [vmem:[%s1 + $0x758] sm:$0xff]
      %v434 = vld [vmem:[%s1 + $0x760] sm:$0xff]
      %v435 = vld [vmem:[%s1 + $0x768] sm:$0xff]
      %v436 = vld [vmem:[%s1 + $0x770] sm:$0xff]
      %v437 = vld [vmem:[%s1 + $0x778] sm:$0xff]
      %v438 = vld [vmem:[%s1 + $0x780] sm:$0xff]
      %v439 = vld [vmem:[%s1 + $0x788] sm:$0xff]
      %v440 = vld [vmem:[%s1 + $0x790] sm:$0xff]
      %v441 = vld [vmem:[%s1 + $0x798] sm:$0xff]
      %v442 = vld [vmem:[%s1 + $0x7a0] sm:$0xff]
      %v443 = vld [vmem:[%s1 + $0x7a8] sm:$0xff]
      %v444 = vld [vmem:[%s1 + $0x7b0] sm:$0xff]
      %v445 = vld [vmem:[%s1 + $0x7b8] sm:$0xff]
      %v446 = vld [vmem:[%s1 + $0x7c0] sm:$0xff]
      %v447 = vld [vmem:[%s1 + $0x7c8] sm:$0xff]
      %v448 = vld [vmem:[%s1 + $0x7d0] sm:$0xff]
      %v449 = vld [vmem:[%s1 + $0x7d8] sm:$0xff]
      %v450 = vld [vmem:[%s1 + $0x7e0] sm:$0xff]
      %v451 = vld [vmem:[%s1 + $0x7e8] sm:$0xff]
      %v452 = vld [vmem:[%s1 + $0x7f0] sm:$0xff]
      %v453 = vld [vmem:[%s1 + $0x7f8] sm:$0xff]
      %v454 = vld [vmem:[%s1 + $0x800] sm:$0xff]
      %v455 = vld [vmem:[%s1 + $0x808] sm:$0xff]
      %v456 = vld [vmem:[%s1 + $0x810] sm:$0xff]
      %v457 = vld [vmem:[%s1 + $0x818] sm:$0xff]
      %v458 = vld [vmem:[%s1 + $0x820] sm:$0xff]
      %v459 = vld [vmem:[%s1 + $0x828] sm:$0xff]
      %v460 = vld [vmem:[%s1 + $0x830] sm:$0xff]
      %v461 = vld [vmem:[%s1 + $0x838] sm:$0xff]
      %v462 = vld [vmem:[%s1 + $0x840] sm:$0xff]
      %v463 = vld [vmem:[%s1 + $0x848] sm:$0xff]
      %v464 = vld [vmem:[%s1 + $0x850] sm:$0xff]
      %v465 = vld [vmem:[%s1 + $0x858] sm:$0xff]
      %v466 = vld [vmem:[%s1 + $0x860] sm:$0xff]
      %v467 = vld [vmem:[%s1 + $0x868] sm:$0xff]
      %v468 = vld [vmem:[%s1 + $0x870] sm:$0xff]
      %v469 = vld [vmem:[%s1 + $0x878] sm:$0xff]
      %v470 = vld [vmem:[%s1 + $0x880] sm:$0xff]
      %v471 = vld [vmem:[%s1 + $0x888] sm:$0xff]
      %v472 = vld [vmem:[%s1 + $0x890] sm:$0xff]
      %v473 = vld [vmem:[%s1 + $0x898] sm:$0xff]
      %v474 = vld [vmem:[%s1 + $0x8a0] sm:$0xff]
      %v475 = vld [vmem:[%s1 + $0x8a8] sm:$0xff]
      %v476 = vld [vmem:[%s1 + $0x8b0] sm:$0xff]
      %v477 = vld [vmem:[%s1 + $0x8b8] sm:$0xff]
      %v478 = vld [vmem:[%s1 + $0x8c0] sm:$0xff]
      %v479 = vld [vmem:[%s1 + $0x8c8] sm:$0xff]
      %v480 = vld [vmem:[%s1 + $0x8d0] sm:$0xff]
      %v481 = vld [vmem:[%s1 + $0x8d8] sm:$0xff]
      %v482 = vld [vmem:[%s1 + $0x8e0] sm:$0xff]
      %v483 = vld [vmem:[%s1 + $0x8e8] sm:$0xff]
      %v484 = vld [vmem:[%s1 + $0x8f0] sm:$0xff]
      %v485 = vld [vmem:[%s1 + $0x8f8] sm:$0xff]
      %v486 = vld [vmem:[%s2] sm:$0xff]
      %v487 = vld [vmem:[%s2 + $0x8] sm:$0xff]
      %v488 = vld [vmem:[%s2 + $0x10] sm:$0xff]
      %v489 = vld [vmem:[%s3] sm:$0x3f]
      %v490 = vld [vmem:[%s192] sm:$0xff]
      %v491 = vld [vmem:[%s192 + $0x8] sm:$0xf]
      %v492 = vlaneseq
      %vm493 = vcmp.ge.s32.totalorder %v492, 0
      %vm494 = vcmp.lt.s32.totalorder %v492, 768
      %vm495 = vmand %vm493, %vm494
      %496 = vst.msk [vmem:[%s197] ss:$8 sm:$0xf] %vm495, %v489
      %497 = vst.msk [vmem:[%s197] ss:$8 sm:$0x30] %vm495, %v489
      %499 = vst [vmem:[#allocation1] ss:$4 sm:$0xff] %v490
      %s501 = scalar_lea.vmem [#allocation1], 32
      %502 = vst [vmem:[%s501] ss:$4 sm:$0xff] %v491
      %v503 = vld.sshfl [vmem:[#allocation1] sm:$0xff pattern:$0x73625140]
      %v504 = vld.sshfl [vmem:[#allocation1 + $0x8] sm:$0xff pattern:$0x73625140]
      %v505 = vld.sshfl [vmem:[#allocation1 + $0x10] sm:$0xff pattern:$0x73625140]
      %v506 = vld.sshfl [vmem:[#allocation1 + $0x18] sm:$0xff pattern:$0x73625140]
      %v507 = vld.sshfl [vmem:[#allocation1 + $0x20] sm:$0xff pattern:$0x73625140]
      %v508 = vld.sshfl [vmem:[#allocation1 + $0x28] sm:$0xff pattern:$0x73625140]
      %v803 = vunpack.c.l.b16 %v198
      %v804 = vunpack.c.h.b16 %v198
      %v805 = vunpack.c.l.b16 %v199
      %v806 = vunpack.c.h.b16 %v199
      %v807 = vunpack.c.l.b16 %v200
      %v808 = vunpack.c.h.b16 %v200
      %v809 = vunpack.c.l.b16 %v201
      %v810 = vunpack.c.h.b16 %v201
      %v811 = vunpack.c.l.b16 %v202
      %v812 = vunpack.c.h.b16 %v202
      %v813 = vunpack.c.l.b16 %v203
      %v814 = vunpack.c.h.b16 %v203
      %v815 = vunpack.c.l.b16 %v204
      %v816 = vunpack.c.h.b16 %v204
      %v817 = vunpack.c.l.b16 %v205
      %v818 = vunpack.c.h.b16 %v205
      %v819 = vunpack.c.l.b16 %v206
      %v820 = vunpack.c.h.b16 %v206
      %v821 = vunpack.c.l.b16 %v207
      %v822 = vunpack.c.h.b16 %v207
      %v823 = vunpack.c.l.b16 %v208
      %v824 = vunpack.c.h.b16 %v208
      %v825 = vunpack.c.l.b16 %v209
      %v826 = vunpack.c.h.b16 %v209
      %v827 = vunpack.c.l.b16 %v210
      %v828 = vunpack.c.h.b16 %v210
      %v829 = vunpack.c.l.b16 %v211
      %v830 = vunpack.c.h.b16 %v211
      %v831 = vunpack.c.l.b16 %v212
      %v832 = vunpack.c.h.b16 %v212
      %v833 = vunpack.c.l.b16 %v213
      %v834 = vunpack.c.h.b16 %v213
      %v835 = vunpack.c.l.b16 %v214
      %v836 = vunpack.c.h.b16 %v214
      %v837 = vunpack.c.l.b16 %v215
      %v838 = vunpack.c.h.b16 %v215
      %v839 = vunpack.c.l.b16 %v216
      %v840 = vunpack.c.h.b16 %v216
      %v841 = vunpack.c.l.b16 %v217
      %v842 = vunpack.c.h.b16 %v217
      %v843 = vunpack.c.l.b16 %v218
      %v844 = vunpack.c.h.b16 %v218
      %v845 = vunpack.c.l.b16 %v219
      %v846 = vunpack.c.h.b16 %v219
      %v847 = vunpack.c.l.b16 %v220
      %v848 = vunpack.c.h.b16 %v220
      %v849 = vunpack.c.l.b16 %v221
      %v850 = vunpack.c.h.b16 %v221
      %v851 = vunpack.c.l.b16 %v222
      %v852 = vunpack.c.h.b16 %v222
      %v853 = vunpack.c.l.b16 %v223
      %v854 = vunpack.c.h.b16 %v223
      %v855 = vunpack.c.l.b16 %v224
      %v856 = vunpack.c.h.b16 %v224
      %v857 = vunpack.c.l.b16 %v225
      %v858 = vunpack.c.h.b16 %v225
      %v859 = vunpack.c.l.b16 %v226
      %v860 = vunpack.c.h.b16 %v226
      %v861 = vunpack.c.l.b16 %v227
      %v862 = vunpack.c.h.b16 %v227
      %v863 = vunpack.c.l.b16 %v228
      %v864 = vunpack.c.h.b16 %v228
      %v865 = vunpack.c.l.b16 %v229
      %v866 = vunpack.c.h.b16 %v229
      %v867 = vunpack.c.l.b16 %v230
      %v868 = vunpack.c.h.b16 %v230
      %v869 = vunpack.c.l.b16 %v231
      %v870 = vunpack.c.h.b16 %v231
      %v871 = vunpack.c.l.b16 %v232
      %v872 = vunpack.c.h.b16 %v232
      %v873 = vunpack.c.l.b16 %v233
      %v874 = vunpack.c.h.b16 %v233
      %v875 = vunpack.c.l.b16 %v234
      %v876 = vunpack.c.h.b16 %v234
      %v877 = vunpack.c.l.b16 %v235
      %v878 = vunpack.c.h.b16 %v235
      %v879 = vunpack.c.l.b16 %v236
      %v880 = vunpack.c.h.b16 %v236
      %v881 = vunpack.c.l.b16 %v237
      %v882 = vunpack.c.h.b16 %v237
      %v883 = vunpack.c.l.b16 %v238
      %v884 = vunpack.c.h.b16 %v238
      %v885 = vunpack.c.l.b16 %v239
      %v886 = vunpack.c.h.b16 %v239
      %v887 = vunpack.c.l.b16 %v240
      %v888 = vunpack.c.h.b16 %v240
      %v889 = vunpack.c.l.b16 %v241
      %v890 = vunpack.c.h.b16 %v241
      %v891 = vunpack.c.l.b16 %v242
      %v892 = vunpack.c.h.b16 %v242
      %v893 = vunpack.c.l.b16 %v243
      %v894 = vunpack.c.h.b16 %v243
      %v895 = vunpack.c.l.b16 %v244
      %v896 = vunpack.c.h.b16 %v244
      %v897 = vunpack.c.l.b16 %v245
      %v898 = vunpack.c.h.b16 %v245
      %v899 = vunpack.c.l.b16 %v246
      %v900 = vunpack.c.h.b16 %v246
      %v901 = vunpack.c.l.b16 %v247
      %v902 = vunpack.c.h.b16 %v247
      %v903 = vunpack.c.l.b16 %v248
      %v904 = vunpack.c.h.b16 %v248
      %v905 = vunpack.c.l.b16 %v249
      %v906 = vunpack.c.h.b16 %v249
      %v907 = vunpack.c.l.b16 %v250
      %v908 = vunpack.c.h.b16 %v250
      %v909 = vunpack.c.l.b16 %v251
      %v910 = vunpack.c.h.b16 %v251
      %v911 = vunpack.c.l.b16 %v252
      %v912 = vunpack.c.h.b16 %v252
      %v913 = vunpack.c.l.b16 %v253
      %v914 = vunpack.c.h.b16 %v253
      %v915 = vunpack.c.l.b16 %v254
      %v916 = vunpack.c.h.b16 %v254
      %v917 = vunpack.c.l.b16 %v255
      %v918 = vunpack.c.h.b16 %v255
      %v919 = vunpack.c.l.b16 %v256
      %v920 = vunpack.c.h.b16 %v256
      %v921 = vunpack.c.l.b16 %v257
      %v922 = vunpack.c.h.b16 %v257
      %v923 = vunpack.c.l.b16 %v258
      %v924 = vunpack.c.h.b16 %v258
      %v925 = vunpack.c.l.b16 %v259
      %v926 = vunpack.c.h.b16 %v259
      %v927 = vunpack.c.l.b16 %v260
      %v928 = vunpack.c.h.b16 %v260
      %v929 = vunpack.c.l.b16 %v261
      %v930 = vunpack.c.h.b16 %v261
      %v931 = vunpack.c.l.b16 %v262
      %v932 = vunpack.c.h.b16 %v262
      %v933 = vunpack.c.l.b16 %v263
      %v934 = vunpack.c.h.b16 %v263
      %v935 = vunpack.c.l.b16 %v264
      %v936 = vunpack.c.h.b16 %v264
      %v937 = vunpack.c.l.b16 %v265
      %v938 = vunpack.c.h.b16 %v265
      %v939 = vunpack.c.l.b16 %v266
      %v940 = vunpack.c.h.b16 %v266
      %v941 = vunpack.c.l.b16 %v267
      %v942 = vunpack.c.h.b16 %v267
      %v943 = vunpack.c.l.b16 %v268
      %v944 = vunpack.c.h.b16 %v268
      %v945 = vunpack.c.l.b16 %v269
      %v946 = vunpack.c.h.b16 %v269
      %v947 = vunpack.c.l.b16 %v270
      %v948 = vunpack.c.h.b16 %v270
      %v949 = vunpack.c.l.b16 %v271
      %v950 = vunpack.c.h.b16 %v271
      %v951 = vunpack.c.l.b16 %v272
      %v952 = vunpack.c.h.b16 %v272
      %v953 = vunpack.c.l.b16 %v273
      %v954 = vunpack.c.h.b16 %v273
      %v955 = vunpack.c.l.b16 %v274
      %v956 = vunpack.c.h.b16 %v274
      %v957 = vunpack.c.l.b16 %v275
      %v958 = vunpack.c.h.b16 %v275
      %v959 = vunpack.c.l.b16 %v276
      %v960 = vunpack.c.h.b16 %v276
      %v961 = vunpack.c.l.b16 %v277
      %v962 = vunpack.c.h.b16 %v277
      %v963 = vunpack.c.l.b16 %v278
      %v964 = vunpack.c.h.b16 %v278
      %v965 = vunpack.c.l.b16 %v279
      %v966 = vunpack.c.h.b16 %v279
      %v967 = vunpack.c.l.b16 %v280
      %v968 = vunpack.c.h.b16 %v280
      %v969 = vunpack.c.l.b16 %v281
      %v970 = vunpack.c.h.b16 %v281
      %v971 = vunpack.c.l.b16 %v282
      %v972 = vunpack.c.h.b16 %v282
      %v973 = vunpack.c.l.b16 %v283
      %v974 = vunpack.c.h.b16 %v283
      %v975 = vunpack.c.l.b16 %v284
      %v976 = vunpack.c.h.b16 %v284
      %v977 = vunpack.c.l.b16 %v285
      %v978 = vunpack.c.h.b16 %v285
      %v979 = vunpack.c.l.b16 %v286
      %v980 = vunpack.c.h.b16 %v286
      %v981 = vunpack.c.l.b16 %v287
      %v982 = vunpack.c.h.b16 %v287
      %v983 = vunpack.c.l.b16 %v288
      %v984 = vunpack.c.h.b16 %v288
      %v985 = vunpack.c.l.b16 %v289
      %v986 = vunpack.c.h.b16 %v289
      %v987 = vunpack.c.l.b16 %v290
      %v988 = vunpack.c.h.b16 %v290
      %v989 = vunpack.c.l.b16 %v291
      %v990 = vunpack.c.h.b16 %v291
      %v991 = vunpack.c.l.b16 %v292
      %v992 = vunpack.c.h.b16 %v292
      %v993 = vunpack.c.l.b16 %v293
      %v994 = vunpack.c.h.b16 %v293
      %v995 = vunpack.c.l.b16 %v294
      %v996 = vunpack.c.h.b16 %v294
      %v997 = vunpack.c.l.b16 %v295
      %v998 = vunpack.c.h.b16 %v295
      %v999 = vunpack.c.l.b16 %v296
      %v1000 = vunpack.c.h.b16 %v296
      %v1001 = vunpack.c.l.b16 %v297
      %v1002 = vunpack.c.h.b16 %v297
      %v1003 = vunpack.c.l.b16 %v298
      %v1004 = vunpack.c.h.b16 %v298
      %v1005 = vunpack.c.l.b16 %v299
      %v1006 = vunpack.c.h.b16 %v299
      %v1007 = vunpack.c.l.b16 %v300
      %v1008 = vunpack.c.h.b16 %v300
      %v1009 = vunpack.c.l.b16 %v301
      %v1010 = vunpack.c.h.b16 %v301
      %v1011 = vunpack.c.l.b16 %v302
      %v1012 = vunpack.c.h.b16 %v302
      %v1013 = vunpack.c.l.b16 %v303
      %v1014 = vunpack.c.h.b16 %v303
      %v1015 = vunpack.c.l.b16 %v304
      %v1016 = vunpack.c.h.b16 %v304
      %v1017 = vunpack.c.l.b16 %v305
      %v1018 = vunpack.c.h.b16 %v305
      %v1019 = vunpack.c.l.b16 %v306
      %v1020 = vunpack.c.h.b16 %v306
      %v1021 = vunpack.c.l.b16 %v307
      %v1022 = vunpack.c.h.b16 %v307
      %v1023 = vunpack.c.l.b16 %v308
      %v1024 = vunpack.c.h.b16 %v308
      %v1025 = vunpack.c.l.b16 %v309
      %v1026 = vunpack.c.h.b16 %v309
      %v1027 = vunpack.c.l.b16 %v310
      %v1028 = vunpack.c.h.b16 %v310
      %v1029 = vunpack.c.l.b16 %v311
      %v1030 = vunpack.c.h.b16 %v311
      %v1031 = vunpack.c.l.b16 %v312
      %v1032 = vunpack.c.h.b16 %v312
      %v1033 = vunpack.c.l.b16 %v313
      %v1034 = vunpack.c.h.b16 %v313
      %v1035 = vunpack.c.l.b16 %v314
      %v1036 = vunpack.c.h.b16 %v314
      %v1037 = vunpack.c.l.b16 %v315
      %v1038 = vunpack.c.h.b16 %v315
      %v1039 = vunpack.c.l.b16 %v316
      %v1040 = vunpack.c.h.b16 %v316
      %v1041 = vunpack.c.l.b16 %v317
      %v1042 = vunpack.c.h.b16 %v317
      %v1043 = vunpack.c.l.b16 %v318
      %v1044 = vunpack.c.h.b16 %v318
      %v1045 = vunpack.c.l.b16 %v319
      %v1046 = vunpack.c.h.b16 %v319
      %v1047 = vunpack.c.l.b16 %v320
      %v1048 = vunpack.c.h.b16 %v320
      %v1049 = vunpack.c.l.b16 %v321
      %v1050 = vunpack.c.h.b16 %v321
      %v1051 = vunpack.c.l.b16 %v322
      %v1052 = vunpack.c.h.b16 %v322
      %v1053 = vunpack.c.l.b16 %v323
      %v1054 = vunpack.c.h.b16 %v323
      %v1055 = vunpack.c.l.b16 %v324
      %v1056 = vunpack.c.h.b16 %v324
      %v1057 = vunpack.c.l.b16 %v325
      %v1058 = vunpack.c.h.b16 %v325
      %v1059 = vunpack.c.l.b16 %v326
      %v1060 = vunpack.c.h.b16 %v326
      %v1061 = vunpack.c.l.b16 %v327
      %v1062 = vunpack.c.h.b16 %v327
      %v1063 = vunpack.c.l.b16 %v328
      %v1064 = vunpack.c.h.b16 %v328
      %v1065 = vunpack.c.l.b16 %v329
      %v1066 = vunpack.c.h.b16 %v329
      %v1067 = vunpack.c.l.b16 %v330
      %v1068 = vunpack.c.h.b16 %v330
      %v1069 = vunpack.c.l.b16 %v331
      %v1070 = vunpack.c.h.b16 %v331
      %v1071 = vunpack.c.l.b16 %v332
      %v1072 = vunpack.c.h.b16 %v332
      %v1073 = vunpack.c.l.b16 %v333
      %v1074 = vunpack.c.h.b16 %v333
      %v1075 = vunpack.c.l.b16 %v334
      %v1076 = vunpack.c.h.b16 %v334
      %v1077 = vunpack.c.l.b16 %v335
      %v1078 = vunpack.c.h.b16 %v335
      %v1079 = vunpack.c.l.b16 %v336
      %v1080 = vunpack.c.h.b16 %v336
      %v1081 = vunpack.c.l.b16 %v337
      %v1082 = vunpack.c.h.b16 %v337
      %v1083 = vunpack.c.l.b16 %v338
      %v1084 = vunpack.c.h.b16 %v338
      %v1085 = vunpack.c.l.b16 %v339
      %v1086 = vunpack.c.h.b16 %v339
      %v1087 = vunpack.c.l.b16 %v340
      %v1088 = vunpack.c.h.b16 %v340
      %v1089 = vunpack.c.l.b16 %v341
      %v1090 = vunpack.c.h.b16 %v341
      %v1091 = vunpack.c.l.b16 %v342
      %v1092 = vunpack.c.h.b16 %v342
      %v1093 = vunpack.c.l.b16 %v343
      %v1094 = vunpack.c.h.b16 %v343
      %v1095 = vunpack.c.l.b16 %v344
      %v1096 = vunpack.c.h.b16 %v344
      %v1097 = vunpack.c.l.b16 %v345
      %v1098 = vunpack.c.h.b16 %v345
      %v1099 = vunpack.c.l.b16 %v346
      %v1100 = vunpack.c.h.b16 %v346
      %v1101 = vunpack.c.l.b16 %v347
      %v1102 = vunpack.c.h.b16 %v347
      %v1103 = vunpack.c.l.b16 %v348
      %v1104 = vunpack.c.h.b16 %v348
      %v1105 = vunpack.c.l.b16 %v349
      %v1106 = vunpack.c.h.b16 %v349
      %v1107 = vunpack.c.l.b16 %v350
      %v1108 = vunpack.c.h.b16 %v350
      %v1109 = vunpack.c.l.b16 %v351
      %v1110 = vunpack.c.h.b16 %v351
      %v1111 = vunpack.c.l.b16 %v352
      %v1112 = vunpack.c.h.b16 %v352
      %v1113 = vunpack.c.l.b16 %v353
      %v1114 = vunpack.c.h.b16 %v353
      %v1115 = vunpack.c.l.b16 %v354
      %v1116 = vunpack.c.h.b16 %v354
      %v1117 = vunpack.c.l.b16 %v355
      %v1118 = vunpack.c.h.b16 %v355
      %v1119 = vunpack.c.l.b16 %v356
      %v1120 = vunpack.c.h.b16 %v356
      %v1121 = vunpack.c.l.b16 %v357
      %v1122 = vunpack.c.h.b16 %v357
      %v1123 = vunpack.c.l.b16 %v358
      %v1124 = vunpack.c.h.b16 %v358
      %v1125 = vunpack.c.l.b16 %v359
      %v1126 = vunpack.c.h.b16 %v359
      %v1127 = vunpack.c.l.b16 %v360
      %v1128 = vunpack.c.h.b16 %v360
      %v1129 = vunpack.c.l.b16 %v361
      %v1130 = vunpack.c.h.b16 %v361
      %v1131 = vunpack.c.l.b16 %v362
      %v1132 = vunpack.c.h.b16 %v362
      %v1133 = vunpack.c.l.b16 %v363
      %v1134 = vunpack.c.h.b16 %v363
      %v1135 = vunpack.c.l.b16 %v364
      %v1136 = vunpack.c.h.b16 %v364
      %v1137 = vunpack.c.l.b16 %v365
      %v1138 = vunpack.c.h.b16 %v365
      %v1139 = vunpack.c.l.b16 %v366
      %v1140 = vunpack.c.h.b16 %v366
      %v1141 = vunpack.c.l.b16 %v367
      %v1142 = vunpack.c.h.b16 %v367
      %v1143 = vunpack.c.l.b16 %v368
      %v1144 = vunpack.c.h.b16 %v368
      %v1145 = vunpack.c.l.b16 %v369
      %v1146 = vunpack.c.h.b16 %v369
      %v1147 = vunpack.c.l.b16 %v370
      %v1148 = vunpack.c.h.b16 %v370
      %v1149 = vunpack.c.l.b16 %v371
      %v1150 = vunpack.c.h.b16 %v371
      %v1151 = vunpack.c.l.b16 %v372
      %v1152 = vunpack.c.h.b16 %v372
      %v1153 = vunpack.c.l.b16 %v373
      %v1154 = vunpack.c.h.b16 %v373
      %v1155 = vunpack.c.l.b16 %v374
      %v1156 = vunpack.c.h.b16 %v374
      %v1157 = vunpack.c.l.b16 %v375
      %v1158 = vunpack.c.h.b16 %v375
      %v1159 = vunpack.c.l.b16 %v376
      %v1160 = vunpack.c.h.b16 %v376
      %v1161 = vunpack.c.l.b16 %v377
      %v1162 = vunpack.c.h.b16 %v377
      %v1163 = vunpack.c.l.b16 %v378
      %v1164 = vunpack.c.h.b16 %v378
      %v1165 = vunpack.c.l.b16 %v379
      %v1166 = vunpack.c.h.b16 %v379
      %v1167 = vunpack.c.l.b16 %v380
      %v1168 = vunpack.c.h.b16 %v380
      %v1169 = vunpack.c.l.b16 %v381
      %v1170 = vunpack.c.h.b16 %v381
      %v1171 = vunpack.c.l.b16 %v382
      %v1172 = vunpack.c.h.b16 %v382
      %v1173 = vunpack.c.l.b16 %v383
      %v1174 = vunpack.c.h.b16 %v383
      %v1175 = vunpack.c.l.b16 %v384
      %v1176 = vunpack.c.h.b16 %v384
      %v1177 = vunpack.c.l.b16 %v385
      %v1178 = vunpack.c.h.b16 %v385
      %v1179 = vunpack.c.l.b16 %v386
      %v1180 = vunpack.c.h.b16 %v386
      %v1181 = vunpack.c.l.b16 %v387
      %v1182 = vunpack.c.h.b16 %v387
      %v1183 = vunpack.c.l.b16 %v388
      %v1184 = vunpack.c.h.b16 %v388
      %v1185 = vunpack.c.l.b16 %v389
      %v1186 = vunpack.c.h.b16 %v389
      %v1187 = vunpack.c.l.b16 %v390
      %v1188 = vunpack.c.h.b16 %v390
      %v1189 = vunpack.c.l.b16 %v391
      %v1190 = vunpack.c.h.b16 %v391
      %v1191 = vunpack.c.l.b16 %v392
      %v1192 = vunpack.c.h.b16 %v392
      %v1193 = vunpack.c.l.b16 %v393
      %v1194 = vunpack.c.h.b16 %v393
      %v1195 = vunpack.c.l.b16 %v394
      %v1196 = vunpack.c.h.b16 %v394
      %v1197 = vunpack.c.l.b16 %v395
      %v1198 = vunpack.c.h.b16 %v395
      %v1199 = vunpack.c.l.b16 %v396
      %v1200 = vunpack.c.h.b16 %v396
      %v1201 = vunpack.c.l.b16 %v397
      %v1202 = vunpack.c.h.b16 %v397
      %v1203 = vunpack.c.l.b16 %v398
      %v1204 = vunpack.c.h.b16 %v398
      %v1205 = vunpack.c.l.b16 %v399
      %v1206 = vunpack.c.h.b16 %v399
      %v1207 = vunpack.c.l.b16 %v400
      %v1208 = vunpack.c.h.b16 %v400
      %v1209 = vunpack.c.l.b16 %v401
      %v1210 = vunpack.c.h.b16 %v401
      %v1211 = vunpack.c.l.b16 %v402
      %v1212 = vunpack.c.h.b16 %v402
      %v1213 = vunpack.c.l.b16 %v403
      %v1214 = vunpack.c.h.b16 %v403
      %v1215 = vunpack.c.l.b16 %v404
      %v1216 = vunpack.c.h.b16 %v404
      %v1217 = vunpack.c.l.b16 %v405
      %v1218 = vunpack.c.h.b16 %v405
      %v1219 = vunpack.c.l.b16 %v406
      %v1220 = vunpack.c.h.b16 %v406
      %v1221 = vunpack.c.l.b16 %v407
      %v1222 = vunpack.c.h.b16 %v407
      %v1223 = vunpack.c.l.b16 %v408
      %v1224 = vunpack.c.h.b16 %v408
      %v1225 = vunpack.c.l.b16 %v409
      %v1226 = vunpack.c.h.b16 %v409
      %v1227 = vunpack.c.l.b16 %v410
      %v1228 = vunpack.c.h.b16 %v410
      %v1229 = vunpack.c.l.b16 %v411
      %v1230 = vunpack.c.h.b16 %v411
      %v1231 = vunpack.c.l.b16 %v412
      %v1232 = vunpack.c.h.b16 %v412
      %v1233 = vunpack.c.l.b16 %v413
      %v1234 = vunpack.c.h.b16 %v413
      %v1235 = vunpack.c.l.b16 %v414
      %v1236 = vunpack.c.h.b16 %v414
      %v1237 = vunpack.c.l.b16 %v415
      %v1238 = vunpack.c.h.b16 %v415
      %v1239 = vunpack.c.l.b16 %v416
      %v1240 = vunpack.c.h.b16 %v416
      %v1241 = vunpack.c.l.b16 %v417
      %v1242 = vunpack.c.h.b16 %v417
      %v1243 = vunpack.c.l.b16 %v418
      %v1244 = vunpack.c.h.b16 %v418
      %v1245 = vunpack.c.l.b16 %v419
      %v1246 = vunpack.c.h.b16 %v419
      %v1247 = vunpack.c.l.b16 %v420
      %v1248 = vunpack.c.h.b16 %v420
      %v1249 = vunpack.c.l.b16 %v421
      %v1250 = vunpack.c.h.b16 %v421
      %v1251 = vunpack.c.l.b16 %v422
      %v1252 = vunpack.c.h.b16 %v422
      %v1253 = vunpack.c.l.b16 %v423
      %v1254 = vunpack.c.h.b16 %v423
      %v1255 = vunpack.c.l.b16 %v424
      %v1256 = vunpack.c.h.b16 %v424
      %v1257 = vunpack.c.l.b16 %v425
      %v1258 = vunpack.c.h.b16 %v425
      %v1259 = vunpack.c.l.b16 %v426
      %v1260 = vunpack.c.h.b16 %v426
      %v1261 = vunpack.c.l.b16 %v427
      %v1262 = vunpack.c.h.b16 %v427
      %v1263 = vunpack.c.l.b16 %v428
      %v1264 = vunpack.c.h.b16 %v428
      %v1265 = vunpack.c.l.b16 %v429
      %v1266 = vunpack.c.h.b16 %v429
      %v1267 = vunpack.c.l.b16 %v430
      %v1268 = vunpack.c.h.b16 %v430
      %v1269 = vunpack.c.l.b16 %v431
      %v1270 = vunpack.c.h.b16 %v431
      %v1271 = vunpack.c.l.b16 %v432
      %v1272 = vunpack.c.h.b16 %v432
      %v1273 = vunpack.c.l.b16 %v433
      %v1274 = vunpack.c.h.b16 %v433
      %v1275 = vunpack.c.l.b16 %v434
      %v1276 = vunpack.c.h.b16 %v434
      %v1277 = vunpack.c.l.b16 %v435
      %v1278 = vunpack.c.h.b16 %v435
      %v1279 = vunpack.c.l.b16 %v436
      %v1280 = vunpack.c.h.b16 %v436
      %v1281 = vunpack.c.l.b16 %v437
      %v1282 = vunpack.c.h.b16 %v437
      %v1283 = vunpack.c.l.b16 %v438
      %v1284 = vunpack.c.h.b16 %v438
      %v1285 = vunpack.c.l.b16 %v439
      %v1286 = vunpack.c.h.b16 %v439
      %v1287 = vunpack.c.l.b16 %v440
      %v1288 = vunpack.c.h.b16 %v440
      %v1289 = vunpack.c.l.b16 %v441
      %v1290 = vunpack.c.h.b16 %v441
      %v1291 = vunpack.c.l.b16 %v442
      %v1292 = vunpack.c.h.b16 %v442
      %v1293 = vunpack.c.l.b16 %v443
      %v1294 = vunpack.c.h.b16 %v443
      %v1295 = vunpack.c.l.b16 %v444
      %v1296 = vunpack.c.h.b16 %v444
      %v1297 = vunpack.c.l.b16 %v445
      %v1298 = vunpack.c.h.b16 %v445
      %v1299 = vunpack.c.l.b16 %v446
      %v1300 = vunpack.c.h.b16 %v446
      %v1301 = vunpack.c.l.b16 %v447
      %v1302 = vunpack.c.h.b16 %v447
      %v1303 = vunpack.c.l.b16 %v448
      %v1304 = vunpack.c.h.b16 %v448
      %v1305 = vunpack.c.l.b16 %v449
      %v1306 = vunpack.c.h.b16 %v449
      %v1307 = vunpack.c.l.b16 %v450
      %v1308 = vunpack.c.h.b16 %v450
      %v1309 = vunpack.c.l.b16 %v451
      %v1310 = vunpack.c.h.b16 %v451
      %v1311 = vunpack.c.l.b16 %v452
      %v1312 = vunpack.c.h.b16 %v452
      %v1313 = vunpack.c.l.b16 %v453
      %v1314 = vunpack.c.h.b16 %v453
      %v1315 = vunpack.c.l.b16 %v454
      %v1316 = vunpack.c.h.b16 %v454
      %v1317 = vunpack.c.l.b16 %v455
      %v1318 = vunpack.c.h.b16 %v455
      %v1319 = vunpack.c.l.b16 %v456
      %v1320 = vunpack.c.h.b16 %v456
      %v1321 = vunpack.c.l.b16 %v457
      %v1322 = vunpack.c.h.b16 %v457
      %v1323 = vunpack.c.l.b16 %v458
      %v1324 = vunpack.c.h.b16 %v458
      %v1325 = vunpack.c.l.b16 %v459
      %v1326 = vunpack.c.h.b16 %v459
      %v1327 = vunpack.c.l.b16 %v460
      %v1328 = vunpack.c.h.b16 %v460
      %v1329 = vunpack.c.l.b16 %v461
      %v1330 = vunpack.c.h.b16 %v461
      %v1331 = vunpack.c.l.b16 %v462
      %v1332 = vunpack.c.h.b16 %v462
      %v1333 = vunpack.c.l.b16 %v463
      %v1334 = vunpack.c.h.b16 %v463
      %v1335 = vunpack.c.l.b16 %v464
      %v1336 = vunpack.c.h.b16 %v464
      %v1337 = vunpack.c.l.b16 %v465
      %v1338 = vunpack.c.h.b16 %v465
      %v1339 = vunpack.c.l.b16 %v466
      %v1340 = vunpack.c.h.b16 %v466
      %v1341 = vunpack.c.l.b16 %v467
      %v1342 = vunpack.c.h.b16 %v467
      %v1343 = vunpack.c.l.b16 %v468
      %v1344 = vunpack.c.h.b16 %v468
      %v1345 = vunpack.c.l.b16 %v469
      %v1346 = vunpack.c.h.b16 %v469
      %v1347 = vunpack.c.l.b16 %v470
      %v1348 = vunpack.c.h.b16 %v470
      %v1349 = vunpack.c.l.b16 %v471
      %v1350 = vunpack.c.h.b16 %v471
      %v1351 = vunpack.c.l.b16 %v472
      %v1352 = vunpack.c.h.b16 %v472
      %v1353 = vunpack.c.l.b16 %v473
      %v1354 = vunpack.c.h.b16 %v473
      %v1355 = vunpack.c.l.b16 %v474
      %v1356 = vunpack.c.h.b16 %v474
      %v1357 = vunpack.c.l.b16 %v475
      %v1358 = vunpack.c.h.b16 %v475
      %v1359 = vunpack.c.l.b16 %v476
      %v1360 = vunpack.c.h.b16 %v476
      %v1361 = vunpack.c.l.b16 %v477
      %v1362 = vunpack.c.h.b16 %v477
      %v1363 = vunpack.c.l.b16 %v478
      %v1364 = vunpack.c.h.b16 %v478
      %v1365 = vunpack.c.l.b16 %v479
      %v1366 = vunpack.c.h.b16 %v479
      %v1367 = vunpack.c.l.b16 %v480
      %v1368 = vunpack.c.h.b16 %v480
      %v1369 = vunpack.c.l.b16 %v481
      %v1370 = vunpack.c.h.b16 %v481
      %v1371 = vunpack.c.l.b16 %v482
      %v1372 = vunpack.c.h.b16 %v482
      %v1373 = vunpack.c.l.b16 %v483
      %v1374 = vunpack.c.h.b16 %v483
      %v1375 = vunpack.c.l.b16 %v484
      %v1376 = vunpack.c.h.b16 %v484
      %v1377 = vunpack.c.l.b16 %v485
      %v1378 = vunpack.c.h.b16 %v485
      %v1379 = vpack.c.b16 %v809, %v803
      %v1380 = vpack.c.b16 %v810, %v804
      %v1381 = vpack.c.b16 %v811, %v805
      %v1382 = vpack.c.b16 %v812, %v806
      %v1383 = vpack.c.b16 %v813, %v807
      %v1384 = vpack.c.b16 %v814, %v808
      %v1385 = vpack.c.b16 %v821, %v815
      %v1386 = vpack.c.b16 %v822, %v816
      %v1387 = vpack.c.b16 %v823, %v817
      %v1388 = vpack.c.b16 %v824, %v818
      %v1389 = vpack.c.b16 %v825, %v819
      %v1390 = vpack.c.b16 %v826, %v820
      %v1391 = vpack.c.b16 %v833, %v827
      %v1392 = vpack.c.b16 %v834, %v828
      %v1393 = vpack.c.b16 %v835, %v829
      %v1394 = vpack.c.b16 %v836, %v830
      %v1395 = vpack.c.b16 %v837, %v831
      %v1396 = vpack.c.b16 %v838, %v832
      %v1397 = vpack.c.b16 %v845, %v839
      %v1398 = vpack.c.b16 %v846, %v840
      %v1399 = vpack.c.b16 %v847, %v841
      %v1400 = vpack.c.b16 %v848, %v842
      %v1401 = vpack.c.b16 %v849, %v843
      %v1402 = vpack.c.b16 %v850, %v844
      %v1403 = vpack.c.b16 %v857, %v851
      %v1404 = vpack.c.b16 %v858, %v852
      %v1405 = vpack.c.b16 %v859, %v853
      %v1406 = vpack.c.b16 %v860, %v854
      %v1407 = vpack.c.b16 %v861, %v855
      %v1408 = vpack.c.b16 %v862, %v856
      %v1409 = vpack.c.b16 %v869, %v863
      %v1410 = vpack.c.b16 %v870, %v864
      %v1411 = vpack.c.b16 %v871, %v865
      %v1412 = vpack.c.b16 %v872, %v866
      %v1413 = vpack.c.b16 %v873, %v867
      %v1414 = vpack.c.b16 %v874, %v868
      %v1415 = vpack.c.b16 %v881, %v875
      %v1416 = vpack.c.b16 %v882, %v876
      %v1417 = vpack.c.b16 %v883, %v877
      %v1418 = vpack.c.b16 %v884, %v878
      %v1419 = vpack.c.b16 %v885, %v879
      %v1420 = vpack.c.b16 %v886, %v880
      %v1421 = vpack.c.b16 %v893, %v887
      %v1422 = vpack.c.b16 %v894, %v888
      %v1423 = vpack.c.b16 %v895, %v889
      %v1424 = vpack.c.b16 %v896, %v890
      %v1425 = vpack.c.b16 %v897, %v891
      %v1426 = vpack.c.b16 %v898, %v892
      %v1427 = vpack.c.b16 %v905, %v899
      %v1428 = vpack.c.b16 %v906, %v900
      %v1429 = vpack.c.b16 %v907, %v901
      %v1430 = vpack.c.b16 %v908, %v902
      %v1431 = vpack.c.b16 %v909, %v903
      %v1432 = vpack.c.b16 %v910, %v904
      %v1433 = vpack.c.b16 %v917, %v911
      %v1434 = vpack.c.b16 %v918, %v912
      %v1435 = vpack.c.b16 %v919, %v913
      %v1436 = vpack.c.b16 %v920, %v914
      %v1437 = vpack.c.b16 %v921, %v915
      %v1438 = vpack.c.b16 %v922, %v916
      %v1439 = vpack.c.b16 %v929, %v923
      %v1440 = vpack.c.b16 %v930, %v924
      %v1441 = vpack.c.b16 %v931, %v925
      %v1442 = vpack.c.b16 %v932, %v926
      %v1443 = vpack.c.b16 %v933, %v927
      %v1444 = vpack.c.b16 %v934, %v928
      %v1445 = vpack.c.b16 %v941, %v935
      %v1446 = vpack.c.b16 %v942, %v936
      %v1447 = vpack.c.b16 %v943, %v937
      %v1448 = vpack.c.b16 %v944, %v938
      %v1449 = vpack.c.b16 %v945, %v939
      %v1450 = vpack.c.b16 %v946, %v940
      %v1451 = vpack.c.b16 %v953, %v947
      %v1452 = vpack.c.b16 %v954, %v948
      %v1453 = vpack.c.b16 %v955, %v949
      %v1454 = vpack.c.b16 %v956, %v950
      %v1455 = vpack.c.b16 %v957, %v951
      %v1456 = vpack.c.b16 %v958, %v952
      %v1457 = vpack.c.b16 %v965, %v959
      %v1458 = vpack.c.b16 %v966, %v960
      %v1459 = vpack.c.b16 %v967, %v961
      %v1460 = vpack.c.b16 %v968, %v962
      %v1461 = vpack.c.b16 %v969, %v963
      %v1462 = vpack.c.b16 %v970, %v964
      %v1463 = vpack.c.b16 %v977, %v971
      %v1464 = vpack.c.b16 %v978, %v972
      %v1465 = vpack.c.b16 %v979, %v973
      %v1466 = vpack.c.b16 %v980, %v974
      %v1467 = vpack.c.b16 %v981, %v975
      %v1468 = vpack.c.b16 %v982, %v976
      %v1469 = vpack.c.b16 %v989, %v983
      %v1470 = vpack.c.b16 %v990, %v984
      %v1471 = vpack.c.b16 %v991, %v985
      %v1472 = vpack.c.b16 %v992, %v986
      %v1473 = vpack.c.b16 %v993, %v987
      %v1474 = vpack.c.b16 %v994, %v988
      %v1475 = vpack.c.b16 %v1001, %v995
      %v1476 = vpack.c.b16 %v1002, %v996
      %v1477 = vpack.c.b16 %v1003, %v997
      %v1478 = vpack.c.b16 %v1004, %v998
      %v1479 = vpack.c.b16 %v1005, %v999
      %v1480 = vpack.c.b16 %v1006, %v1000
      %v1481 = vpack.c.b16 %v1013, %v1007
      %v1482 = vpack.c.b16 %v1014, %v1008
      %v1483 = vpack.c.b16 %v1015, %v1009
      %v1484 = vpack.c.b16 %v1016, %v1010
      %v1485 = vpack.c.b16 %v1017, %v1011
      %v1486 = vpack.c.b16 %v1018, %v1012
      %v1487 = vpack.c.b16 %v1025, %v1019
      %v1488 = vpack.c.b16 %v1026, %v1020
      %v1489 = vpack.c.b16 %v1027, %v1021
      %v1490 = vpack.c.b16 %v1028, %v1022
      %v1491 = vpack.c.b16 %v1029, %v1023
      %v1492 = vpack.c.b16 %v1030, %v1024
      %v1493 = vpack.c.b16 %v1037, %v1031
      %v1494 = vpack.c.b16 %v1038, %v1032
      %v1495 = vpack.c.b16 %v1039, %v1033
      %v1496 = vpack.c.b16 %v1040, %v1034
      %v1497 = vpack.c.b16 %v1041, %v1035
      %v1498 = vpack.c.b16 %v1042, %v1036
      %v1499 = vpack.c.b16 %v1049, %v1043
      %v1500 = vpack.c.b16 %v1050, %v1044
      %v1501 = vpack.c.b16 %v1051, %v1045
      %v1502 = vpack.c.b16 %v1052, %v1046
      %v1503 = vpack.c.b16 %v1053, %v1047
      %v1504 = vpack.c.b16 %v1054, %v1048
      %v1505 = vpack.c.b16 %v1061, %v1055
      %v1506 = vpack.c.b16 %v1062, %v1056
      %v1507 = vpack.c.b16 %v1063, %v1057
      %v1508 = vpack.c.b16 %v1064, %v1058
      %v1509 = vpack.c.b16 %v1065, %v1059
      %v1510 = vpack.c.b16 %v1066, %v1060
      %v1511 = vpack.c.b16 %v1073, %v1067
      %v1512 = vpack.c.b16 %v1074, %v1068
      %v1513 = vpack.c.b16 %v1075, %v1069
      %v1514 = vpack.c.b16 %v1076, %v1070
      %v1515 = vpack.c.b16 %v1077, %v1071
      %v1516 = vpack.c.b16 %v1078, %v1072
      %v1517 = vpack.c.b16 %v1085, %v1079
      %v1518 = vpack.c.b16 %v1086, %v1080
      %v1519 = vpack.c.b16 %v1087, %v1081
      %v1520 = vpack.c.b16 %v1088, %v1082
      %v1521 = vpack.c.b16 %v1089, %v1083
      %v1522 = vpack.c.b16 %v1090, %v1084
      %v1523 = vpack.c.b16 %v1097, %v1091
      %v1524 = vpack.c.b16 %v1098, %v1092
      %v1525 = vpack.c.b16 %v1099, %v1093
      %v1526 = vpack.c.b16 %v1100, %v1094
      %v1527 = vpack.c.b16 %v1101, %v1095
      %v1528 = vpack.c.b16 %v1102, %v1096
      %v1529 = vpack.c.b16 %v1109, %v1103
      %v1530 = vpack.c.b16 %v1110, %v1104
      %v1531 = vpack.c.b16 %v1111, %v1105
      %v1532 = vpack.c.b16 %v1112, %v1106
      %v1533 = vpack.c.b16 %v1113, %v1107
      %v1534 = vpack.c.b16 %v1114, %v1108
      %v1535 = vpack.c.b16 %v1121, %v1115
      %v1536 = vpack.c.b16 %v1122, %v1116
      %v1537 = vpack.c.b16 %v1123, %v1117
      %v1538 = vpack.c.b16 %v1124, %v1118
      %v1539 = vpack.c.b16 %v1125, %v1119
      %v1540 = vpack.c.b16 %v1126, %v1120
      %v1541 = vpack.c.b16 %v1133, %v1127
      %v1542 = vpack.c.b16 %v1134, %v1128
      %v1543 = vpack.c.b16 %v1135, %v1129
      %v1544 = vpack.c.b16 %v1136, %v1130
      %v1545 = vpack.c.b16 %v1137, %v1131
      %v1546 = vpack.c.b16 %v1138, %v1132
      %v1547 = vpack.c.b16 %v1145, %v1139
      %v1548 = vpack.c.b16 %v1146, %v1140
      %v1549 = vpack.c.b16 %v1147, %v1141
      %v1550 = vpack.c.b16 %v1148, %v1142
      %v1551 = vpack.c.b16 %v1149, %v1143
      %v1552 = vpack.c.b16 %v1150, %v1144
      %v1553 = vpack.c.b16 %v1157, %v1151
      %v1554 = vpack.c.b16 %v1158, %v1152
      %v1555 = vpack.c.b16 %v1159, %v1153
      %v1556 = vpack.c.b16 %v1160, %v1154
      %v1557 = vpack.c.b16 %v1161, %v1155
      %v1558 = vpack.c.b16 %v1162, %v1156
      %v1559 = vpack.c.b16 %v1169, %v1163
      %v1560 = vpack.c.b16 %v1170, %v1164
      %v1561 = vpack.c.b16 %v1171, %v1165
      %v1562 = vpack.c.b16 %v1172, %v1166
      %v1563 = vpack.c.b16 %v1173, %v1167
      %v1564 = vpack.c.b16 %v1174, %v1168
      %v1565 = vpack.c.b16 %v1181, %v1175
      %v1566 = vpack.c.b16 %v1182, %v1176
      %v1567 = vpack.c.b16 %v1183, %v1177
      %v1568 = vpack.c.b16 %v1184, %v1178
      %v1569 = vpack.c.b16 %v1185, %v1179
      %v1570 = vpack.c.b16 %v1186, %v1180
      %v1571 = vpack.c.b16 %v1193, %v1187
      %v1572 = vpack.c.b16 %v1194, %v1188
      %v1573 = vpack.c.b16 %v1195, %v1189
      %v1574 = vpack.c.b16 %v1196, %v1190
      %v1575 = vpack.c.b16 %v1197, %v1191
      %v1576 = vpack.c.b16 %v1198, %v1192
      %v1577 = vpack.c.b16 %v1205, %v1199
      %v1578 = vpack.c.b16 %v1206, %v1200
      %v1579 = vpack.c.b16 %v1207, %v1201
      %v1580 = vpack.c.b16 %v1208, %v1202
      %v1581 = vpack.c.b16 %v1209, %v1203
      %v1582 = vpack.c.b16 %v1210, %v1204
      %v1583 = vpack.c.b16 %v1217, %v1211
      %v1584 = vpack.c.b16 %v1218, %v1212
      %v1585 = vpack.c.b16 %v1219, %v1213
      %v1586 = vpack.c.b16 %v1220, %v1214
      %v1587 = vpack.c.b16 %v1221, %v1215
      %v1588 = vpack.c.b16 %v1222, %v1216
      %v1589 = vpack.c.b16 %v1229, %v1223
      %v1590 = vpack.c.b16 %v1230, %v1224
      %v1591 = vpack.c.b16 %v1231, %v1225
      %v1592 = vpack.c.b16 %v1232, %v1226
      %v1593 = vpack.c.b16 %v1233, %v1227
      %v1594 = vpack.c.b16 %v1234, %v1228
      %v1595 = vpack.c.b16 %v1241, %v1235
      %v1596 = vpack.c.b16 %v1242, %v1236
      %v1597 = vpack.c.b16 %v1243, %v1237
      %v1598 = vpack.c.b16 %v1244, %v1238
      %v1599 = vpack.c.b16 %v1245, %v1239
      %v1600 = vpack.c.b16 %v1246, %v1240
      %v1601 = vpack.c.b16 %v1253, %v1247
      %v1602 = vpack.c.b16 %v1254, %v1248
      %v1603 = vpack.c.b16 %v1255, %v1249
      %v1604 = vpack.c.b16 %v1256, %v1250
      %v1605 = vpack.c.b16 %v1257, %v1251
      %v1606 = vpack.c.b16 %v1258, %v1252
      %v1607 = vpack.c.b16 %v1265, %v1259
      %v1608 = vpack.c.b16 %v1266, %v1260
      %v1609 = vpack.c.b16 %v1267, %v1261
      %v1610 = vpack.c.b16 %v1268, %v1262
      %v1611 = vpack.c.b16 %v1269, %v1263
      %v1612 = vpack.c.b16 %v1270, %v1264
      %v1613 = vpack.c.b16 %v1277, %v1271
      %v1614 = vpack.c.b16 %v1278, %v1272
      %v1615 = vpack.c.b16 %v1279, %v1273
      %v1616 = vpack.c.b16 %v1280, %v1274
      %v1617 = vpack.c.b16 %v1281, %v1275
      %v1618 = vpack.c.b16 %v1282, %v1276
      %v1619 = vpack.c.b16 %v1289, %v1283
      %v1620 = vpack.c.b16 %v1290, %v1284
      %v1621 = vpack.c.b16 %v1291, %v1285
      %v1622 = vpack.c.b16 %v1292, %v1286
      %v1623 = vpack.c.b16 %v1293, %v1287
      %v1624 = vpack.c.b16 %v1294, %v1288
      %v1625 = vpack.c.b16 %v1301, %v1295
      %v1626 = vpack.c.b16 %v1302, %v1296
      %v1627 = vpack.c.b16 %v1303, %v1297
      %v1628 = vpack.c.b16 %v1304, %v1298
      %v1629 = vpack.c.b16 %v1305, %v1299
      %v1630 = vpack.c.b16 %v1306, %v1300
      %v1631 = vpack.c.b16 %v1313, %v1307
      %v1632 = vpack.c.b16 %v1314, %v1308
      %v1633 = vpack.c.b16 %v1315, %v1309
      %v1634 = vpack.c.b16 %v1316, %v1310
      %v1635 = vpack.c.b16 %v1317, %v1311
      %v1636 = vpack.c.b16 %v1318, %v1312
      %v1637 = vpack.c.b16 %v1325, %v1319
      %v1638 = vpack.c.b16 %v1326, %v1320
      %v1639 = vpack.c.b16 %v1327, %v1321
      %v1640 = vpack.c.b16 %v1328, %v1322
      %v1641 = vpack.c.b16 %v1329, %v1323
      %v1642 = vpack.c.b16 %v1330, %v1324
      %v1643 = vpack.c.b16 %v1337, %v1331
      %v1644 = vpack.c.b16 %v1338, %v1332
      %v1645 = vpack.c.b16 %v1339, %v1333
      %v1646 = vpack.c.b16 %v1340, %v1334
      %v1647 = vpack.c.b16 %v1341, %v1335
      %v1648 = vpack.c.b16 %v1342, %v1336
      %v1649 = vpack.c.b16 %v1349, %v1343
      %v1650 = vpack.c.b16 %v1350, %v1344
      %v1651 = vpack.c.b16 %v1351, %v1345
      %v1652 = vpack.c.b16 %v1352, %v1346
      %v1653 = vpack.c.b16 %v1353, %v1347
      %v1654 = vpack.c.b16 %v1354, %v1348
      %v1655 = vpack.c.b16 %v1361, %v1355
      %v1656 = vpack.c.b16 %v1362, %v1356
      %v1657 = vpack.c.b16 %v1363, %v1357
      %v1658 = vpack.c.b16 %v1364, %v1358
      %v1659 = vpack.c.b16 %v1365, %v1359
      %v1660 = vpack.c.b16 %v1366, %v1360
      %v1661 = vpack.c.b16 %v1373, %v1367
      %v1662 = vpack.c.b16 %v1374, %v1368
      %v1663 = vpack.c.b16 %v1375, %v1369
      %v1664 = vpack.c.b16 %v1376, %v1370
      %v1665 = vpack.c.b16 %v1377, %v1371
      %v1666 = vpack.c.b16 %v1378, %v1372
      %1958 = vst [vmem:[#allocation1] ss:$2 sm:$0xff] %v486
      %s1959 = scalar_lea.vmem [#allocation1], 16
      %1960 = vst [vmem:[%s1959] ss:$2 sm:$0xff] %v487
      %s1961 = scalar_lea.vmem [#allocation1], 32
      %1962 = vst [vmem:[%s1961] ss:$2 sm:$0xff] %v488
      %v1963 = vld.sshfl [vmem:[#allocation1] sm:$0xff pattern:$0x75316420]
      %v1964 = vld.sshfl [vmem:[#allocation1 + $0x8] sm:$0xff pattern:$0x75316420]
      %v1965 = vld.sshfl [vmem:[#allocation1 + $0x10] sm:$0xff pattern:$0x75316420]
      %v1966 = vld.sshfl [vmem:[#allocation1 + $0x18] sm:$0xff pattern:$0x75316420]
      %v1967 = vld.sshfl [vmem:[#allocation1 + $0x20] sm:$0xff pattern:$0x75316420]
      %v1968 = vld.sshfl [vmem:[#allocation1 + $0x28] sm:$0xff pattern:$0x75316420]
      %1975 = vmatpush.bf16.msra.mxu0 %v1421
      %1976 = vmatpush.bf16.msra.mxu0 %v1415
      %1977 = vmatpush.bf16.msra.mxu0 %v1409
      %1978 = vmatpush.bf16.msra.mxu0 %v1403
      %1979 = vmatpush.bf16.msra.mxu0 %v1397
      %1980 = vmatpush.bf16.msra.mxu0 %v1391
      %1981 = vmatpush.bf16.msra.mxu0 %v1385
      %1982 = vmatpush.bf16.msra.mxu0 %v1379
      %1983 = vmatmul.bf16.gmra.mxu0 %v503
      %v1984 = vpop.f32.mrf.mxu0
      %v1985 = vadd.f32 %v1963, %v1984
      %v1986 = vpop.f32.mrf.mxu0
      %1987 = vdwg.mxu0
      %1988 = vmatpush.bf16.msra.mxu0 %v1469
      %1989 = vmatpush.bf16.msra.mxu0 %v1463
      %1990 = vmatpush.bf16.msra.mxu0 %v1457
      %1991 = vmatpush.bf16.msra.mxu0 %v1451
      %1992 = vmatpush.bf16.msra.mxu0 %v1445
      %1993 = vmatpush.bf16.msra.mxu0 %v1439
      %1994 = vmatpush.bf16.msra.mxu0 %v1433
      %1995 = vmatpush.bf16.msra.mxu0 %v1427
      %1996 = vmatmul.bf16.gmra.mxu0 %v504
      %v1997 = vpop.f32.mrf.mxu0
      %v1998 = vadd.f32 %v1985, %v1997
      %v1999 = vpop.f32.mrf.mxu0
      %2000 = vdwg.mxu0
      %2001 = vmatpush.bf16.msra.mxu0 %v1517
      %2002 = vmatpush.bf16.msra.mxu0 %v1511
      %2003 = vmatpush.bf16.msra.mxu0 %v1505
      %2004 = vmatpush.bf16.msra.mxu0 %v1499
      %2005 = vmatpush.bf16.msra.mxu0 %v1493
      %2006 = vmatpush.bf16.msra.mxu0 %v1487
      %2007 = vmatpush.bf16.msra.mxu0 %v1481
      %2008 = vmatpush.bf16.msra.mxu0 %v1475
      %2009 = vmatmul.bf16.gmra.mxu0 %v505
      %v2010 = vpop.f32.mrf.mxu0
      %v2011 = vadd.f32 %v1998, %v2010
      %v2012 = vpop.f32.mrf.mxu0
      %2013 = vdwg.mxu0
      %2014 = vmatpush.bf16.msra.mxu0 %v1565
      %2015 = vmatpush.bf16.msra.mxu0 %v1559
      %2016 = vmatpush.bf16.msra.mxu0 %v1553
      %2017 = vmatpush.bf16.msra.mxu0 %v1547
      %2018 = vmatpush.bf16.msra.mxu0 %v1541
      %2019 = vmatpush.bf16.msra.mxu0 %v1535
      %2020 = vmatpush.bf16.msra.mxu0 %v1529
      %2021 = vmatpush.bf16.msra.mxu0 %v1523
      %2022 = vmatmul.bf16.gmra.mxu0 %v506
      %v2023 = vpop.f32.mrf.mxu0
      %v2024 = vadd.f32 %v2011, %v2023
      %v2025 = vpop.f32.mrf.mxu0
      %2026 = vdwg.mxu0
      %2027 = vmatpush.bf16.msra.mxu0 %v1613
      %2028 = vmatpush.bf16.msra.mxu0 %v1607
      %2029 = vmatpush.bf16.msra.mxu0 %v1601
      %2030 = vmatpush.bf16.msra.mxu0 %v1595
      %2031 = vmatpush.bf16.msra.mxu0 %v1589
      %2032 = vmatpush.bf16.msra.mxu0 %v1583
      %2033 = vmatpush.bf16.msra.mxu0 %v1577
      %2034 = vmatpush.bf16.msra.mxu0 %v1571
      %2035 = vmatmul.bf16.gmra.mxu0 %v507
      %v2036 = vpop.f32.mrf.mxu0
      %v2037 = vadd.f32 %v2024, %v2036
      %v2038 = vpop.f32.mrf.mxu0
      %2039 = vdwg.mxu0
      %2040 = vmatpush.bf16.msra.mxu0 %v1661
      %2041 = vmatpush.bf16.msra.mxu0 %v1655
      %2042 = vmatpush.bf16.msra.mxu0 %v1649
      %2043 = vmatpush.bf16.msra.mxu0 %v1643
      %2044 = vmatpush.bf16.msra.mxu0 %v1637
      %2045 = vmatpush.bf16.msra.mxu0 %v1631
      %2046 = vmatpush.bf16.msra.mxu0 %v1625
      %2047 = vmatpush.bf16.msra.mxu0 %v1619
      %2048 = vmatmul.bf16.gmra.mxu0 %v508
      %v2049 = vpop.f32.mrf.mxu0
      %v2050 = vadd.f32 %v2037, %v2049
      %v2051 = vpop.f32.mrf.mxu0
      %2052 = vdwg.mxu0
      %2053 = vmatpush.bf16.msra.mxu0 %v1422
      %2054 = vmatpush.bf16.msra.mxu0 %v1416
      %2055 = vmatpush.bf16.msra.mxu0 %v1410
      %2056 = vmatpush.bf16.msra.mxu0 %v1404
      %2057 = vmatpush.bf16.msra.mxu0 %v1398
      %2058 = vmatpush.bf16.msra.mxu0 %v1392
      %2059 = vmatpush.bf16.msra.mxu0 %v1386
      %2060 = vmatpush.bf16.msra.mxu0 %v1380
      %2061 = vmatmul.bf16.gmra.mxu0 %v503
      %v2062 = vpop.f32.mrf.mxu0
      %v2063 = vadd.f32 %v1964, %v2062
      %v2064 = vpop.f32.mrf.mxu0
      %2065 = vdwg.mxu0
      %2066 = vmatpush.bf16.msra.mxu0 %v1470
      %2067 = vmatpush.bf16.msra.mxu0 %v1464
      %2068 = vmatpush.bf16.msra.mxu0 %v1458
      %2069 = vmatpush.bf16.msra.mxu0 %v1452
      %2070 = vmatpush.bf16.msra.mxu0 %v1446
      %2071 = vmatpush.bf16.msra.mxu0 %v1440
      %2072 = vmatpush.bf16.msra.mxu0 %v1434
      %2073 = vmatpush.bf16.msra.mxu0 %v1428
      %2074 = vmatmul.bf16.gmra.mxu0 %v504
      %v2075 = vpop.f32.mrf.mxu0
      %v2076 = vadd.f32 %v2063, %v2075
      %v2077 = vpop.f32.mrf.mxu0
      %2078 = vdwg.mxu0
      %2079 = vmatpush.bf16.msra.mxu0 %v1518
      %2080 = vmatpush.bf16.msra.mxu0 %v1512
      %2081 = vmatpush.bf16.msra.mxu0 %v1506
      %2082 = vmatpush.bf16.msra.mxu0 %v1500
      %2083 = vmatpush.bf16.msra.mxu0 %v1494
      %2084 = vmatpush.bf16.msra.mxu0 %v1488
      %2085 = vmatpush.bf16.msra.mxu0 %v1482
      %2086 = vmatpush.bf16.msra.mxu0 %v1476
      %2087 = vmatmul.bf16.gmra.mxu0 %v505
      %v2088 = vpop.f32.mrf.mxu0
      %v2089 = vadd.f32 %v2076, %v2088
      %v2090 = vpop.f32.mrf.mxu0
      %2091 = vdwg.mxu0
      %2092 = vmatpush.bf16.msra.mxu0 %v1566
      %2093 = vmatpush.bf16.msra.mxu0 %v1560
      %2094 = vmatpush.bf16.msra.mxu0 %v1554
      %2095 = vmatpush.bf16.msra.mxu0 %v1548
      %2096 = vmatpush.bf16.msra.mxu0 %v1542
      %2097 = vmatpush.bf16.msra.mxu0 %v1536
      %2098 = vmatpush.bf16.msra.mxu0 %v1530
      %2099 = vmatpush.bf16.msra.mxu0 %v1524
      %2100 = vmatmul.bf16.gmra.mxu0 %v506
      %v2101 = vpop.f32.mrf.mxu0
      %v2102 = vadd.f32 %v2089, %v2101
      %v2103 = vpop.f32.mrf.mxu0
      %2104 = vdwg.mxu0
      %2105 = vmatpush.bf16.msra.mxu0 %v1614
      %2106 = vmatpush.bf16.msra.mxu0 %v1608
      %2107 = vmatpush.bf16.msra.mxu0 %v1602
      %2108 = vmatpush.bf16.msra.mxu0 %v1596
      %2109 = vmatpush.bf16.msra.mxu0 %v1590
      %2110 = vmatpush.bf16.msra.mxu0 %v1584
      %2111 = vmatpush.bf16.msra.mxu0 %v1578
      %2112 = vmatpush.bf16.msra.mxu0 %v1572
      %2113 = vmatmul.bf16.gmra.mxu0 %v507
      %v2114 = vpop.f32.mrf.mxu0
      %v2115 = vadd.f32 %v2102, %v2114
      %v2116 = vpop.f32.mrf.mxu0
      %2117 = vdwg.mxu0
      %2118 = vmatpush.bf16.msra.mxu0 %v1662
      %2119 = vmatpush.bf16.msra.mxu0 %v1656
      %2120 = vmatpush.bf16.msra.mxu0 %v1650
      %2121 = vmatpush.bf16.msra.mxu0 %v1644
      %2122 = vmatpush.bf16.msra.mxu0 %v1638
      %2123 = vmatpush.bf16.msra.mxu0 %v1632
      %2124 = vmatpush.bf16.msra.mxu0 %v1626
      %2125 = vmatpush.bf16.msra.mxu0 %v1620
      %2126 = vmatmul.bf16.gmra.mxu0 %v508
      %v2127 = vpop.f32.mrf.mxu0
      %v2128 = vadd.f32 %v2115, %v2127
      %v2129 = vpop.f32.mrf.mxu0
      %2130 = vdwg.mxu0
      %2131 = vmatpush.bf16.msra.mxu0 %v1423
      %2132 = vmatpush.bf16.msra.mxu0 %v1417
      %2133 = vmatpush.bf16.msra.mxu0 %v1411
      %2134 = vmatpush.bf16.msra.mxu0 %v1405
      %2135 = vmatpush.bf16.msra.mxu0 %v1399
      %2136 = vmatpush.bf16.msra.mxu0 %v1393
      %2137 = vmatpush.bf16.msra.mxu0 %v1387
      %2138 = vmatpush.bf16.msra.mxu0 %v1381
      %2139 = vmatmul.bf16.gmra.mxu0 %v503
      %v2140 = vpop.f32.mrf.mxu0
      %v2141 = vadd.f32 %v1965, %v2140
      %v2142 = vpop.f32.mrf.mxu0
      %2143 = vdwg.mxu0
      %2144 = vmatpush.bf16.msra.mxu0 %v1471
      %2145 = vmatpush.bf16.msra.mxu0 %v1465
      %2146 = vmatpush.bf16.msra.mxu0 %v1459
      %2147 = vmatpush.bf16.msra.mxu0 %v1453
      %2148 = vmatpush.bf16.msra.mxu0 %v1447
      %2149 = vmatpush.bf16.msra.mxu0 %v1441
      %2150 = vmatpush.bf16.msra.mxu0 %v1435
      %2151 = vmatpush.bf16.msra.mxu0 %v1429
      %2152 = vmatmul.bf16.gmra.mxu0 %v504
      %v2153 = vpop.f32.mrf.mxu0
      %v2154 = vadd.f32 %v2141, %v2153
      %v2155 = vpop.f32.mrf.mxu0
      %2156 = vdwg.mxu0
      %2157 = vmatpush.bf16.msra.mxu0 %v1519
      %2158 = vmatpush.bf16.msra.mxu0 %v1513
      %2159 = vmatpush.bf16.msra.mxu0 %v1507
      %2160 = vmatpush.bf16.msra.mxu0 %v1501
      %2161 = vmatpush.bf16.msra.mxu0 %v1495
      %2162 = vmatpush.bf16.msra.mxu0 %v1489
      %2163 = vmatpush.bf16.msra.mxu0 %v1483
      %2164 = vmatpush.bf16.msra.mxu0 %v1477
      %2165 = vmatmul.bf16.gmra.mxu0 %v505
      %v2166 = vpop.f32.mrf.mxu0
      %v2167 = vadd.f32 %v2154, %v2166
      %v2168 = vpop.f32.mrf.mxu0
      %2169 = vdwg.mxu0
      %2170 = vmatpush.bf16.msra.mxu0 %v1567
      %2171 = vmatpush.bf16.msra.mxu0 %v1561
      %2172 = vmatpush.bf16.msra.mxu0 %v1555
      %2173 = vmatpush.bf16.msra.mxu0 %v1549
      %2174 = vmatpush.bf16.msra.mxu0 %v1543
      %2175 = vmatpush.bf16.msra.mxu0 %v1537
      %2176 = vmatpush.bf16.msra.mxu0 %v1531
      %2177 = vmatpush.bf16.msra.mxu0 %v1525
      %2178 = vmatmul.bf16.gmra.mxu0 %v506
      %v2179 = vpop.f32.mrf.mxu0
      %v2180 = vadd.f32 %v2167, %v2179
      %v2181 = vpop.f32.mrf.mxu0
      %2182 = vdwg.mxu0
      %2183 = vmatpush.bf16.msra.mxu0 %v1615
      %2184 = vmatpush.bf16.msra.mxu0 %v1609
      %2185 = vmatpush.bf16.msra.mxu0 %v1603
      %2186 = vmatpush.bf16.msra.mxu0 %v1597
      %2187 = vmatpush.bf16.msra.mxu0 %v1591
      %2188 = vmatpush.bf16.msra.mxu0 %v1585
      %2189 = vmatpush.bf16.msra.mxu0 %v1579
      %2190 = vmatpush.bf16.msra.mxu0 %v1573
      %2191 = vmatmul.bf16.gmra.mxu0 %v507
      %v2192 = vpop.f32.mrf.mxu0
      %v2193 = vadd.f32 %v2180, %v2192
      %v2194 = vpop.f32.mrf.mxu0
      %2195 = vdwg.mxu0
      %2196 = vmatpush.bf16.msra.mxu0 %v1663
      %2197 = vmatpush.bf16.msra.mxu0 %v1657
      %2198 = vmatpush.bf16.msra.mxu0 %v1651
      %2199 = vmatpush.bf16.msra.mxu0 %v1645
      %2200 = vmatpush.bf16.msra.mxu0 %v1639
      %2201 = vmatpush.bf16.msra.mxu0 %v1633
      %2202 = vmatpush.bf16.msra.mxu0 %v1627
      %2203 = vmatpush.bf16.msra.mxu0 %v1621
      %2204 = vmatmul.bf16.gmra.mxu0 %v508
      %v2205 = vpop.f32.mrf.mxu0
      %v2206 = vadd.f32 %v2193, %v2205
      %v2207 = vpop.f32.mrf.mxu0
      %2208 = vdwg.mxu0
      %2209 = vmatpush.bf16.msra.mxu0 %v1424
      %2210 = vmatpush.bf16.msra.mxu0 %v1418
      %2211 = vmatpush.bf16.msra.mxu0 %v1412
      %2212 = vmatpush.bf16.msra.mxu0 %v1406
      %2213 = vmatpush.bf16.msra.mxu0 %v1400
      %2214 = vmatpush.bf16.msra.mxu0 %v1394
      %2215 = vmatpush.bf16.msra.mxu0 %v1388
      %2216 = vmatpush.bf16.msra.mxu0 %v1382
      %2217 = vmatmul.bf16.gmra.mxu0 %v503
      %v2218 = vpop.f32.mrf.mxu0
      %v2219 = vadd.f32 %v1966, %v2218
      %v2220 = vpop.f32.mrf.mxu0
      %2221 = vdwg.mxu0
      %2222 = vmatpush.bf16.msra.mxu0 %v1472
      %2223 = vmatpush.bf16.msra.mxu0 %v1466
      %2224 = vmatpush.bf16.msra.mxu0 %v1460
      %2225 = vmatpush.bf16.msra.mxu0 %v1454
      %2226 = vmatpush.bf16.msra.mxu0 %v1448
      %2227 = vmatpush.bf16.msra.mxu0 %v1442
      %2228 = vmatpush.bf16.msra.mxu0 %v1436
      %2229 = vmatpush.bf16.msra.mxu0 %v1430
      %2230 = vmatmul.bf16.gmra.mxu0 %v504
      %v2231 = vpop.f32.mrf.mxu0
      %v2232 = vadd.f32 %v2219, %v2231
      %v2233 = vpop.f32.mrf.mxu0
      %2234 = vdwg.mxu0
      %2235 = vmatpush.bf16.msra.mxu0 %v1520
      %2236 = vmatpush.bf16.msra.mxu0 %v1514
      %2237 = vmatpush.bf16.msra.mxu0 %v1508
      %2238 = vmatpush.bf16.msra.mxu0 %v1502
      %2239 = vmatpush.bf16.msra.mxu0 %v1496
      %2240 = vmatpush.bf16.msra.mxu0 %v1490
      %2241 = vmatpush.bf16.msra.mxu0 %v1484
      %2242 = vmatpush.bf16.msra.mxu0 %v1478
      %2243 = vmatmul.bf16.gmra.mxu0 %v505
      %v2244 = vpop.f32.mrf.mxu0
      %v2245 = vadd.f32 %v2232, %v2244
      %v2246 = vpop.f32.mrf.mxu0
      %2247 = vdwg.mxu0
      %2248 = vmatpush.bf16.msra.mxu0 %v1568
      %2249 = vmatpush.bf16.msra.mxu0 %v1562
      %2250 = vmatpush.bf16.msra.mxu0 %v1556
      %2251 = vmatpush.bf16.msra.mxu0 %v1550
      %2252 = vmatpush.bf16.msra.mxu0 %v1544
      %2253 = vmatpush.bf16.msra.mxu0 %v1538
      %2254 = vmatpush.bf16.msra.mxu0 %v1532
      %2255 = vmatpush.bf16.msra.mxu0 %v1526
      %2256 = vmatmul.bf16.gmra.mxu0 %v506
      %v2257 = vpop.f32.mrf.mxu0
      %v2258 = vadd.f32 %v2245, %v2257
      %v2259 = vpop.f32.mrf.mxu0
      %2260 = vdwg.mxu0
      %2261 = vmatpush.bf16.msra.mxu0 %v1616
      %2262 = vmatpush.bf16.msra.mxu0 %v1610
      %2263 = vmatpush.bf16.msra.mxu0 %v1604
      %2264 = vmatpush.bf16.msra.mxu0 %v1598
      %2265 = vmatpush.bf16.msra.mxu0 %v1592
      %2266 = vmatpush.bf16.msra.mxu0 %v1586
      %2267 = vmatpush.bf16.msra.mxu0 %v1580
      %2268 = vmatpush.bf16.msra.mxu0 %v1574
      %2269 = vmatmul.bf16.gmra.mxu0 %v507
      %v2270 = vpop.f32.mrf.mxu0
      %v2271 = vadd.f32 %v2258, %v2270
      %v2272 = vpop.f32.mrf.mxu0
      %2273 = vdwg.mxu0
      %2274 = vmatpush.bf16.msra.mxu0 %v1664
      %2275 = vmatpush.bf16.msra.mxu0 %v1658
      %2276 = vmatpush.bf16.msra.mxu0 %v1652
      %2277 = vmatpush.bf16.msra.mxu0 %v1646
      %2278 = vmatpush.bf16.msra.mxu0 %v1640
      %2279 = vmatpush.bf16.msra.mxu0 %v1634
      %2280 = vmatpush.bf16.msra.mxu0 %v1628
      %2281 = vmatpush.bf16.msra.mxu0 %v1622
      %2282 = vmatmul.bf16.gmra.mxu0 %v508
      %v2283 = vpop.f32.mrf.mxu0
      %v2284 = vadd.f32 %v2271, %v2283
      %v2285 = vpop.f32.mrf.mxu0
      %2286 = vdwg.mxu0
      %2287 = vmatpush.bf16.msra.mxu0 %v1425
      %2288 = vmatpush.bf16.msra.mxu0 %v1419
      %2289 = vmatpush.bf16.msra.mxu0 %v1413
      %2290 = vmatpush.bf16.msra.mxu0 %v1407
      %2291 = vmatpush.bf16.msra.mxu0 %v1401
      %2292 = vmatpush.bf16.msra.mxu0 %v1395
      %2293 = vmatpush.bf16.msra.mxu0 %v1389
      %2294 = vmatpush.bf16.msra.mxu0 %v1383
      %2295 = vmatmul.bf16.gmra.mxu0 %v503
      %v2296 = vpop.f32.mrf.mxu0
      %v2297 = vadd.f32 %v1967, %v2296
      %v2298 = vpop.f32.mrf.mxu0
      %2299 = vdwg.mxu0
      %2300 = vmatpush.bf16.msra.mxu0 %v1473
      %2301 = vmatpush.bf16.msra.mxu0 %v1467
      %2302 = vmatpush.bf16.msra.mxu0 %v1461
      %2303 = vmatpush.bf16.msra.mxu0 %v1455
      %2304 = vmatpush.bf16.msra.mxu0 %v1449
      %2305 = vmatpush.bf16.msra.mxu0 %v1443
      %2306 = vmatpush.bf16.msra.mxu0 %v1437
      %2307 = vmatpush.bf16.msra.mxu0 %v1431
      %2308 = vmatmul.bf16.gmra.mxu0 %v504
      %v2309 = vpop.f32.mrf.mxu0
      %v2310 = vadd.f32 %v2297, %v2309
      %v2311 = vpop.f32.mrf.mxu0
      %2312 = vdwg.mxu0
      %2313 = vmatpush.bf16.msra.mxu0 %v1521
      %2314 = vmatpush.bf16.msra.mxu0 %v1515
      %2315 = vmatpush.bf16.msra.mxu0 %v1509
      %2316 = vmatpush.bf16.msra.mxu0 %v1503
      %2317 = vmatpush.bf16.msra.mxu0 %v1497
      %2318 = vmatpush.bf16.msra.mxu0 %v1491
      %2319 = vmatpush.bf16.msra.mxu0 %v1485
      %2320 = vmatpush.bf16.msra.mxu0 %v1479
      %2321 = vmatmul.bf16.gmra.mxu0 %v505
      %v2322 = vpop.f32.mrf.mxu0
      %v2323 = vadd.f32 %v2310, %v2322
      %v2324 = vpop.f32.mrf.mxu0
      %2325 = vdwg.mxu0
      %2326 = vmatpush.bf16.msra.mxu0 %v1569
      %2327 = vmatpush.bf16.msra.mxu0 %v1563
      %2328 = vmatpush.bf16.msra.mxu0 %v1557
      %2329 = vmatpush.bf16.msra.mxu0 %v1551
      %2330 = vmatpush.bf16.msra.mxu0 %v1545
      %2331 = vmatpush.bf16.msra.mxu0 %v1539
      %2332 = vmatpush.bf16.msra.mxu0 %v1533
      %2333 = vmatpush.bf16.msra.mxu0 %v1527
      %2334 = vmatmul.bf16.gmra.mxu0 %v506
      %v2335 = vpop.f32.mrf.mxu0
      %v2336 = vadd.f32 %v2323, %v2335
      %v2337 = vpop.f32.mrf.mxu0
      %2338 = vdwg.mxu0
      %2339 = vmatpush.bf16.msra.mxu0 %v1617
      %2340 = vmatpush.bf16.msra.mxu0 %v1611
      %2341 = vmatpush.bf16.msra.mxu0 %v1605
      %2342 = vmatpush.bf16.msra.mxu0 %v1599
      %2343 = vmatpush.bf16.msra.mxu0 %v1593
      %2344 = vmatpush.bf16.msra.mxu0 %v1587
      %2345 = vmatpush.bf16.msra.mxu0 %v1581
      %2346 = vmatpush.bf16.msra.mxu0 %v1575
      %2347 = vmatmul.bf16.gmra.mxu0 %v507
      %v2348 = vpop.f32.mrf.mxu0
      %v2349 = vadd.f32 %v2336, %v2348
      %v2350 = vpop.f32.mrf.mxu0
      %2351 = vdwg.mxu0
      %2352 = vmatpush.bf16.msra.mxu0 %v1665
      %2353 = vmatpush.bf16.msra.mxu0 %v1659
      %2354 = vmatpush.bf16.msra.mxu0 %v1653
      %2355 = vmatpush.bf16.msra.mxu0 %v1647
      %2356 = vmatpush.bf16.msra.mxu0 %v1641
      %2357 = vmatpush.bf16.msra.mxu0 %v1635
      %2358 = vmatpush.bf16.msra.mxu0 %v1629
      %2359 = vmatpush.bf16.msra.mxu0 %v1623
      %2360 = vmatmul.bf16.gmra.mxu0 %v508
      %v2361 = vpop.f32.mrf.mxu0
      %v2362 = vadd.f32 %v2349, %v2361
      %v2363 = vpop.f32.mrf.mxu0
      %2364 = vdwg.mxu0
      %2365 = vmatpush.bf16.msra.mxu0 %v1426
      %2366 = vmatpush.bf16.msra.mxu0 %v1420
      %2367 = vmatpush.bf16.msra.mxu0 %v1414
      %2368 = vmatpush.bf16.msra.mxu0 %v1408
      %2369 = vmatpush.bf16.msra.mxu0 %v1402
      %2370 = vmatpush.bf16.msra.mxu0 %v1396
      %2371 = vmatpush.bf16.msra.mxu0 %v1390
      %2372 = vmatpush.bf16.msra.mxu0 %v1384
      %2373 = vmatmul.bf16.gmra.mxu0 %v503
      %v2374 = vpop.f32.mrf.mxu0
      %v2375 = vadd.f32 %v1968, %v2374
      %v2376 = vpop.f32.mrf.mxu0
      %2377 = vdwg.mxu0
      %2378 = vmatpush.bf16.msra.mxu0 %v1474
      %2379 = vmatpush.bf16.msra.mxu0 %v1468
      %2380 = vmatpush.bf16.msra.mxu0 %v1462
      %2381 = vmatpush.bf16.msra.mxu0 %v1456
      %2382 = vmatpush.bf16.msra.mxu0 %v1450
      %2383 = vmatpush.bf16.msra.mxu0 %v1444
      %2384 = vmatpush.bf16.msra.mxu0 %v1438
      %2385 = vmatpush.bf16.msra.mxu0 %v1432
      %2386 = vmatmul.bf16.gmra.mxu0 %v504
      %v2387 = vpop.f32.mrf.mxu0
      %v2388 = vadd.f32 %v2375, %v2387
      %v2389 = vpop.f32.mrf.mxu0
      %2390 = vdwg.mxu0
      %2391 = vmatpush.bf16.msra.mxu0 %v1522
      %2392 = vmatpush.bf16.msra.mxu0 %v1516
      %2393 = vmatpush.bf16.msra.mxu0 %v1510
      %2394 = vmatpush.bf16.msra.mxu0 %v1504
      %2395 = vmatpush.bf16.msra.mxu0 %v1498
      %2396 = vmatpush.bf16.msra.mxu0 %v1492
      %2397 = vmatpush.bf16.msra.mxu0 %v1486
      %2398 = vmatpush.bf16.msra.mxu0 %v1480
      %2399 = vmatmul.bf16.gmra.mxu0 %v505
      %v2400 = vpop.f32.mrf.mxu0
      %v2401 = vadd.f32 %v2388, %v2400
      %v2402 = vpop.f32.mrf.mxu0
      %2403 = vdwg.mxu0
      %2404 = vmatpush.bf16.msra.mxu0 %v1570
      %2405 = vmatpush.bf16.msra.mxu0 %v1564
      %2406 = vmatpush.bf16.msra.mxu0 %v1558
      %2407 = vmatpush.bf16.msra.mxu0 %v1552
      %2408 = vmatpush.bf16.msra.mxu0 %v1546
      %2409 = vmatpush.bf16.msra.mxu0 %v1540
      %2410 = vmatpush.bf16.msra.mxu0 %v1534
      %2411 = vmatpush.bf16.msra.mxu0 %v1528
      %2412 = vmatmul.bf16.gmra.mxu0 %v506
      %v2413 = vpop.f32.mrf.mxu0
      %v2414 = vadd.f32 %v2401, %v2413
      %v2415 = vpop.f32.mrf.mxu0
      %2416 = vdwg.mxu0
      %2417 = vmatpush.bf16.msra.mxu0 %v1618
      %2418 = vmatpush.bf16.msra.mxu0 %v1612
      %2419 = vmatpush.bf16.msra.mxu0 %v1606
      %2420 = vmatpush.bf16.msra.mxu0 %v1600
      %2421 = vmatpush.bf16.msra.mxu0 %v1594
      %2422 = vmatpush.bf16.msra.mxu0 %v1588
      %2423 = vmatpush.bf16.msra.mxu0 %v1582
      %2424 = vmatpush.bf16.msra.mxu0 %v1576
      %2425 = vmatmul.bf16.gmra.mxu0 %v507
      %v2426 = vpop.f32.mrf.mxu0
      %v2427 = vadd.f32 %v2414, %v2426
      %v2428 = vpop.f32.mrf.mxu0
      %2429 = vdwg.mxu0
      %2430 = vmatpush.bf16.msra.mxu0 %v1666
      %2431 = vmatpush.bf16.msra.mxu0 %v1660
      %2432 = vmatpush.bf16.msra.mxu0 %v1654
      %2433 = vmatpush.bf16.msra.mxu0 %v1648
      %2434 = vmatpush.bf16.msra.mxu0 %v1642
      %2435 = vmatpush.bf16.msra.mxu0 %v1636
      %2436 = vmatpush.bf16.msra.mxu0 %v1630
      %2437 = vmatpush.bf16.msra.mxu0 %v1624
      %2438 = vmatmul.bf16.gmra.mxu0 %v508
      %v2439 = vpop.f32.mrf.mxu0
      %v2440 = vadd.f32 %v2427, %v2439
      %v2441 = vpop.f32.mrf.mxu0
      %2442 = vdwg.mxu0
      %v2449 = vrot.slane %v2050, 7
      %v2450 = vrot.slane %v2128, 7
      %v2451 = vrot.slane %v2206, 7
      %v2452 = vrot.slane %v2284, 7
      %v2453 = vrot.slane %v2362, 7
      %v2454 = vrot.slane %v2440, 7
      %2461 = vst [vmem:[%s197] sm:$0x1e] %v2449
      %2462 = vst [vmem:[%s197 + $0x8] sm:$0x1e] %v2450
      %2463 = vst [vmem:[%s197 + $0x10] sm:$0x1e] %v2451
      %2464 = vst [vmem:[%s197 + $0x18] sm:$0x1e] %v2452
      %2465 = vst [vmem:[%s197 + $0x20] sm:$0x1e] %v2453
      %2466 = vst [vmem:[%s197 + $0x28] sm:$0x1e] %v2454
      %p2467 = scmp.lt.s32.totalorder %s15, 1
      %s2468 = scalar_select %p2467, %s15, 1
      %s2469 = smul.addr %s2468, 6
      %s2470 = smul.addr %s2469, 8
      %s2471 = scalar_lea.vmem %s4, %s2470
      // Predicated region
      $region37: #{embeddings_forward.1} parent=35 // pred_check
        %p2472 = pneg %p122
      $region38: #{embeddings_forward.1} parent=35 // pred_check_branch
        %2474 = sbr.rel (%p2472) target = $region40
      $region39: #{embeddings_forward.1} parent=35 // pred_region
        _
      $region40: #{embeddings_forward.1} parent=35 // pred_fallthru
        _
    $region36: #{embeddings_forward.1} parent=5 // pred_fallthru
      _
    %p2475 = scmp.le.s32.totalorder 2, %s10
    // Predicated region
    $region41: #{embeddings_forward.1} parent=5 // pred_check
      %p2476 = pneg %p2475
    $region42: #{embeddings_forward.1} parent=5 // pred_check_branch
      %2478 = sbr.rel (%p2476) target = $region44
    $region43: #{embeddings_forward.1} parent=5 // pred_region
      %s2479 = ssub.s32 %s10, 2
      // Predicated region
      $region45: #{embeddings_forward.1} parent=43 // pred_check
        %p2480 = pneg %p128
      $region46: #{embeddings_forward.1} parent=43 // pred_check_branch
        %2482 = sbr.rel (%p2480) target = $region48
      $region47: #{embeddings_forward.1} parent=43 // pred_region
        %p2483 = scmp.lt.s32.totalorder %s16, 1
        %s2484 = scalar_select %p2483, %s16, 1
        %s2485 = smul.addr %s2484, 6
        %s2486 = smul.addr %s2485, 8
        %s2487 = scalar_lea.vmem %s4, %s2486
      $region48: #{embeddings_forward.1} parent=43 // pred_fallthru
        _
    $region44: #{embeddings_forward.1} parent=5 // pred_fallthru
      _
  $region6: #{embeddings_forward.1} parent=0 // loop_footer
    %s14 = sadd.s32 1, %s10
  $region7: #{embeddings_forward.1} parent=0 // loop_footer_branch
    %9 = sbr.rel target = $region3
  $region8: #{embeddings_forward.1} parent=0 // loop_exit
    _

</llo_original>
